<compile_context>
chip_gen: v7x
topology: tpu7x:2x2x1
jax: 0.10.0
libtpu: 0.0.40
codegen_flags: <defaults>
</compile_context>

<pallas_src>
import functools

import jax
import jax.numpy as jnp
from jax.experimental import pallas as pl
from jax.experimental.pallas import tpu as pltpu


def _spatial_gate_kernel(params_ref, x_ref, o_ref, pad_ref, *, C, H, W, K):
    """Fused ChannelPool + 7x7 conv (BN folded) + sigmoid + rescale.

    params_ref: SMEM (2*K*K + 1,) f32  -- BN-folded conv weights, then bias
    x_ref:      VMEM (1, C, H, W)      -- one batch element
    o_ref:      VMEM (1, C, H, W)
    pad_ref:    VMEM (2, H+K-1, W+K-1) f32 scratch (zero-padded pooled maps)
    """
    P = (K - 1) // 2

    x = x_ref[0].astype(jnp.float32)                  # (C, H, W)

    # ChannelPool: max & mean over the channel (leading) axis -> cheap VPU elementwise.
    cmax = jnp.max(x, axis=0)                         # (H, W)
    cmean = jnp.mean(x, axis=0)                       # (H, W)

    # Zero-padded staging buffer for the "same" 7x7 convolution.
    pad_ref[...] = jnp.zeros_like(pad_ref)
    pad_ref[0, P:P + H, P:P + W] = cmax
    pad_ref[1, P:P + H, P:P + W] = cmean

    # Unrolled shift-and-FMA conv: 2*K lane-offset slices total, kh handled with
    # sublane-only slices of the loaded column (no lane-splitting reshapes).
    acc = jnp.zeros((H, W), jnp.float32)
    for kw in range(K):
        for c in range(2):
            col = pad_ref[c, :, kw:kw + W]            # (H + K - 1, W)
            for kh in range(K):
                wgt = params_ref[c * K * K + kh * K + kw]
                acc = acc + wgt * col[kh:kh + H, :]
    acc = acc + params_ref[2 * K * K]                 # folded BN bias

    # Sigmoid gate, broadcast over channels.
    scale = 1.0 / (1.0 + jnp.exp(-acc))               # (H, W)
    o_ref[0] = (x * scale[None, :, :]).astype(o_ref.dtype)


def spatial_gate(x, conv_w, bn_gamma, bn_beta, bn_mean, bn_var, *, eps=1e-5):
    """x: (N, C, H, W); conv_w: (1, 2, K, K). Returns x * sigmoid(BN(conv(ChannelPool(x))))."""
    N, C, H, W = x.shape
    K = conv_w.shape[-1]

    # Fold eval-mode BatchNorm into the conv: y = s * conv(pooled) + b.
    s = (bn_gamma / jnp.sqrt(bn_var + eps)).astype(jnp.float32)       # (1,)
    w_eff = (conv_w.astype(jnp.float32) * s.reshape(1, 1, 1, 1)).reshape(-1)
    b_eff = (bn_beta.astype(jnp.float32) - bn_mean.astype(jnp.float32) * s).reshape(-1)
    params = jnp.concatenate([w_eff, b_eff])                           # (2*K*K + 1,)

    kernel = functools.partial(_spatial_gate_kernel, C=C, H=H, W=W, K=K)

    return pl.pallas_call(
        kernel,
        out_shape=jax.ShapeDtypeStruct((N, C, H, W), x.dtype),
        grid_spec=pltpu.PrefetchScalarGridSpec(
            num_scalar_prefetch=0,
            grid=(N,),
            in_specs=[
                # 99 folded scalars, whole array resident in SMEM.
                pl.BlockSpec(memory_space=pltpu.MemorySpace.SMEM),
                pl.BlockSpec((1, C, H, W), lambda n: (n, 0, 0, 0)),
            ],
            out_specs=pl.BlockSpec((1, C, H, W), lambda n: (n, 0, 0, 0)),
            scratch_shapes=[pltpu.VMEM((2, H + K - 1, W + K - 1), jnp.float32)],
        ),
        compiler_params=pltpu.CompilerParams(
            dimension_semantics=("parallel",),
        ),
    )(params, x)


def _reference(x, conv_w, bn_gamma, bn_beta, bn_mean, bn_var, *, eps=1e-5):
    """Pure-JAX mirror of the PyTorch forward (eval-mode BatchNorm)."""
    K = conv_w.shape[-1]
    P = (K - 1) // 2
    xf = x.astype(jnp.float32)
    cmax = jnp.max(xf, axis=1, keepdims=True)
    cmean = jnp.mean(xf, axis=1, keepdims=True)
    pooled = jnp.concatenate([cmax, cmean], axis=1)                    # (N, 2, H, W)
    y = jax.lax.conv_general_dilated(
        pooled, conv_w.astype(jnp.float32),
        window_strides=(1, 1), padding=((P, P), (P, P)),
        dimension_numbers=("NCHW", "OIHW", "NCHW"))
    s = bn_gamma / jnp.sqrt(bn_var + eps)
    y = y * s.reshape(1, -1, 1, 1) + (bn_beta - bn_mean * s).reshape(1, -1, 1, 1)
    return (xf * jax.nn.sigmoid(y)).astype(x.dtype)


if __name__ == "__main__":
    key = jax.random.PRNGKey(0)
    k_x, k_w, k_g, k_b, k_m, k_v = jax.random.split(key, 6)

    N, C, H, W = 2, 4, 16, 16
    K = 7

    x = jax.random.normal(k_x, (N, C, H, W), dtype=jnp.float32)
    # Conv2d(2, 1, 7, bias=False) weights (kaiming-uniform-scale).
    conv_w = jax.random.uniform(k_w, (1, 2, K, K), jnp.float32, -0.1, 0.1)
    # Eval-mode BatchNorm2d(1) affine params + running stats (non-trivial to test folding).
    bn_gamma = jax.random.uniform(k_g, (1,), jnp.float32, 0.5, 1.5)
    bn_beta = 0.1 * jax.random.normal(k_b, (1,), jnp.float32)
    bn_mean = 0.1 * jax.random.normal(k_m, (1,), jnp.float32)
    bn_var = jax.random.uniform(k_v, (1,), jnp.float32, 0.5, 1.5)

    out = spatial_gate(x, conv_w, bn_gamma, bn_beta, bn_mean, bn_var)
    out = jax.block_until_ready(out)

    ref = _reference(x, conv_w, bn_gamma, bn_beta, bn_mean, bn_var)
    assert out.shape == (N, C, H, W)
    assert jnp.allclose(out, ref, atol=1e-5, rtol=1e-4), float(jnp.max(jnp.abs(out - ref)))

    print("KERNEL_OK")
</pallas_src>

<mosaic_0001>
module attributes {stable_mosaic.version = 11 : i64} {
  func.func @_spatial_gate_kernel(%arg0: i32, %arg1: memref<99xf32, #tpu.memory_space<smem>>, %arg2: memref<1x4x16x16xf32, #tpu.memory_space<vmem>>, %arg3: memref<1x4x16x16xf32, #tpu.memory_space<vmem>>, %arg4: memref<2x22x22xf32, #tpu.memory_space<vmem>>) attributes {dimension_semantics = [#tpu.dimension_semantics<parallel>], iteration_bounds = array<i64: 2>, scalar_prefetch = 0 : i64, scratch_operands = 1 : i64, tpu.core_type = #tpu.core_type<tc>, window_params = [{transform_indices = @transform_0, window_bounds = array<i64: 99>}, {transform_indices = @transform_1, window_bounds = array<i64: 1, 4, 16, 16>}, {transform_indices = @transform_2, window_bounds = array<i64: 1, 4, 16, 16>}]} {
    %c0 = arith.constant 0 : index
    %c0_0 = arith.constant 0 : index
    %c0_1 = arith.constant 0 : index
    %c0_2 = arith.constant 0 : index
    %0 = vector.load %arg2[%c0, %c0_0, %c0_1, %c0_2] : memref<1x4x16x16xf32, #tpu.memory_space<vmem>>, vector<1x4x16x16xf32>
    %1 = vector.shape_cast %0 : vector<1x4x16x16xf32> to vector<4x16x16xf32>
    %cst = arith.constant dense<0xFF800000> : vector<16x16xf32>
    %2 = vector.multi_reduction <maximumf>, %1, %cst [0] : vector<4x16x16xf32> to vector<16x16xf32>
    %cst_3 = arith.constant dense<0.000000e+00> : vector<16x16xf32>
    %3 = vector.multi_reduction <add>, %1, %cst_3 [0] : vector<4x16x16xf32> to vector<16x16xf32>
    %cst_4 = arith.constant 4.000000e+00 : f32
    %4 = vector.broadcast %cst_4 : f32 to vector<16x16xf32>
    %5 = arith.divf %3, %4 : vector<16x16xf32>
    %cst_5 = arith.constant 0.000000e+00 : f32
    %6 = vector.broadcast %cst_5 : f32 to vector<2x22x22xf32>
    %c0_6 = arith.constant 0 : index
    %c0_7 = arith.constant 0 : index
    %c0_8 = arith.constant 0 : index
    %7 = vector.load %arg4[%c0_6, %c0_7, %c0_8] : memref<2x22x22xf32, #tpu.memory_space<vmem>>, vector<2x22x22xf32>
    tpu.vector_store %arg4[%c0_6, %c0_7, %c0_8], %6 {strides = array<i32>} : memref<2x22x22xf32, #tpu.memory_space<vmem>>, vector<2x22x22xf32>,
    %c0_9 = arith.constant 0 : index
    %c3 = arith.constant 3 : index
    %c3_10 = arith.constant 3 : index
    %8 = vector.load %arg4[%c0_9, %c3, %c3_10] : memref<2x22x22xf32, #tpu.memory_space<vmem>>, vector<1x16x16xf32>
    %9 = vector.shape_cast %8 : vector<1x16x16xf32> to vector<16x16xf32>
    %10 = vector.shape_cast %2 : vector<16x16xf32> to vector<1x16x16xf32>
    tpu.vector_store %arg4[%c0_9, %c3, %c3_10], %10 {strides = array<i32>} : memref<2x22x22xf32, #tpu.memory_space<vmem>>, vector<1x16x16xf32>,
    %c1 = arith.constant 1 : index
    %c3_11 = arith.constant 3 : index
    %c3_12 = arith.constant 3 : index
    %11 = vector.load %arg4[%c1, %c3_11, %c3_12] : memref<2x22x22xf32, #tpu.memory_space<vmem>>, vector<1x16x16xf32>
    %12 = vector.shape_cast %11 : vector<1x16x16xf32> to vector<16x16xf32>
    %13 = vector.shape_cast %5 : vector<16x16xf32> to vector<1x16x16xf32>
    tpu.vector_store %arg4[%c1, %c3_11, %c3_12], %13 {strides = array<i32>} : memref<2x22x22xf32, #tpu.memory_space<vmem>>, vector<1x16x16xf32>,
    %cst_13 = arith.constant 0.000000e+00 : f32
    %14 = vector.broadcast %cst_13 : f32 to vector<16x16xf32>
    %c0_14 = arith.constant 0 : index
    %c0_15 = arith.constant 0 : index
    %c0_16 = arith.constant 0 : index
    %15 = vector.load %arg4[%c0_14, %c0_15, %c0_16] : memref<2x22x22xf32, #tpu.memory_space<vmem>>, vector<1x22x16xf32>
    %16 = vector.shape_cast %15 : vector<1x22x16xf32> to vector<22x16xf32>
    %c0_17 = arith.constant 0 : index
    %17 = memref.load %arg1[%c0_17] : memref<99xf32, #tpu.memory_space<smem>>
    %18 = vector.extract_strided_slice %16 {offsets = [0, 0], sizes = [16, 16], strides = [1, 1]} : vector<22x16xf32> to vector<16x16xf32>
    %19 = vector.broadcast %17 : f32 to vector<16x16xf32>
    %20 = arith.mulf %19, %18 : vector<16x16xf32>
    %21 = arith.addf %14, %20 : vector<16x16xf32>
    %c7 = arith.constant 7 : index
    %22 = memref.load %arg1[%c7] : memref<99xf32, #tpu.memory_space<smem>>
    %23 = vector.extract_strided_slice %16 {offsets = [1, 0], sizes = [16, 16], strides = [1, 1]} : vector<22x16xf32> to vector<16x16xf32>
    %24 = vector.broadcast %22 : f32 to vector<16x16xf32>
    %25 = arith.mulf %24, %23 : vector<16x16xf32>
    %26 = arith.addf %21, %25 : vector<16x16xf32>
    %c14 = arith.constant 14 : index
    %27 = memref.load %arg1[%c14] : memref<99xf32, #tpu.memory_space<smem>>
    %28 = vector.extract_strided_slice %16 {offsets = [2, 0], sizes = [16, 16], strides = [1, 1]} : vector<22x16xf32> to vector<16x16xf32>
    %29 = vector.broadcast %27 : f32 to vector<16x16xf32>
    %30 = arith.mulf %29, %28 : vector<16x16xf32>
    %31 = arith.addf %26, %30 : vector<16x16xf32>
    %c21 = arith.constant 21 : index
    %32 = memref.load %arg1[%c21] : memref<99xf32, #tpu.memory_space<smem>>
    %33 = vector.extract_strided_slice %16 {offsets = [3, 0], sizes = [16, 16], strides = [1, 1]} : vector<22x16xf32> to vector<16x16xf32>
    %34 = vector.broadcast %32 : f32 to vector<16x16xf32>
    %35 = arith.mulf %34, %33 : vector<16x16xf32>
    %36 = arith.addf %31, %35 : vector<16x16xf32>
    %c28 = arith.constant 28 : index
    %37 = memref.load %arg1[%c28] : memref<99xf32, #tpu.memory_space<smem>>
    %38 = vector.extract_strided_slice %16 {offsets = [4, 0], sizes = [16, 16], strides = [1, 1]} : vector<22x16xf32> to vector<16x16xf32>
    %39 = vector.broadcast %37 : f32 to vector<16x16xf32>
    %40 = arith.mulf %39, %38 : vector<16x16xf32>
    %41 = arith.addf %36, %40 : vector<16x16xf32>
    %c35 = arith.constant 35 : index
    %42 = memref.load %arg1[%c35] : memref<99xf32, #tpu.memory_space<smem>>
    %43 = vector.extract_strided_slice %16 {offsets = [5, 0], sizes = [16, 16], strides = [1, 1]} : vector<22x16xf32> to vector<16x16xf32>
    %44 = vector.broadcast %42 : f32 to vector<16x16xf32>
    %45 = arith.mulf %44, %43 : vector<16x16xf32>
    %46 = arith.addf %41, %45 : vector<16x16xf32>
    %c42 = arith.constant 42 : index
    %47 = memref.load %arg1[%c42] : memref<99xf32, #tpu.memory_space<smem>>
    %48 = vector.extract_strided_slice %16 {offsets = [6, 0], sizes = [16, 16], strides = [1, 1]} : vector<22x16xf32> to vector<16x16xf32>
    %49 = vector.broadcast %47 : f32 to vector<16x16xf32>
    %50 = arith.mulf %49, %48 : vector<16x16xf32>
    %51 = arith.addf %46, %50 : vector<16x16xf32>
    %c1_18 = arith.constant 1 : index
    %c0_19 = arith.constant 0 : index
    %c0_20 = arith.constant 0 : index
    %52 = vector.load %arg4[%c1_18, %c0_19, %c0_20] : memref<2x22x22xf32, #tpu.memory_space<vmem>>, vector<1x22x16xf32>
    %53 = vector.shape_cast %52 : vector<1x22x16xf32> to vector<22x16xf32>
    %c49 = arith.constant 49 : index
    %54 = memref.load %arg1[%c49] : memref<99xf32, #tpu.memory_space<smem>>
    %55 = vector.extract_strided_slice %53 {offsets = [0, 0], sizes = [16, 16], strides = [1, 1]} : vector<22x16xf32> to vector<16x16xf32>
    %56 = vector.broadcast %54 : f32 to vector<16x16xf32>
    %57 = arith.mulf %56, %55 : vector<16x16xf32>
    %58 = arith.addf %51, %57 : vector<16x16xf32>
    %c56 = arith.constant 56 : index
    %59 = memref.load %arg1[%c56] : memref<99xf32, #tpu.memory_space<smem>>
    %60 = vector.extract_strided_slice %53 {offsets = [1, 0], sizes = [16, 16], strides = [1, 1]} : vector<22x16xf32> to vector<16x16xf32>
    %61 = vector.broadcast %59 : f32 to vector<16x16xf32>
    %62 = arith.mulf %61, %60 : vector<16x16xf32>
    %63 = arith.addf %58, %62 : vector<16x16xf32>
    %c63 = arith.constant 63 : index
    %64 = memref.load %arg1[%c63] : memref<99xf32, #tpu.memory_space<smem>>
    %65 = vector.extract_strided_slice %53 {offsets = [2, 0], sizes = [16, 16], strides = [1, 1]} : vector<22x16xf32> to vector<16x16xf32>
    %66 = vector.broadcast %64 : f32 to vector<16x16xf32>
    %67 = arith.mulf %66, %65 : vector<16x16xf32>
    %68 = arith.addf %63, %67 : vector<16x16xf32>
    %c70 = arith.constant 70 : index
    %69 = memref.load %arg1[%c70] : memref<99xf32, #tpu.memory_space<smem>>
    %70 = vector.extract_strided_slice %53 {offsets = [3, 0], sizes = [16, 16], strides = [1, 1]} : vector<22x16xf32> to vector<16x16xf32>
    %71 = vector.broadcast %69 : f32 to vector<16x16xf32>
    %72 = arith.mulf %71, %70 : vector<16x16xf32>
    %73 = arith.addf %68, %72 : vector<16x16xf32>
    %c77 = arith.constant 77 : index
    %74 = memref.load %arg1[%c77] : memref<99xf32, #tpu.memory_space<smem>>
    %75 = vector.extract_strided_slice %53 {offsets = [4, 0], sizes = [16, 16], strides = [1, 1]} : vector<22x16xf32> to vector<16x16xf32>
    %76 = vector.broadcast %74 : f32 to vector<16x16xf32>
    %77 = arith.mulf %76, %75 : vector<16x16xf32>
    %78 = arith.addf %73, %77 : vector<16x16xf32>
    %c84 = arith.constant 84 : index
    %79 = memref.load %arg1[%c84] : memref<99xf32, #tpu.memory_space<smem>>
    %80 = vector.extract_strided_slice %53 {offsets = [5, 0], sizes = [16, 16], strides = [1, 1]} : vector<22x16xf32> to vector<16x16xf32>
    %81 = vector.broadcast %79 : f32 to vector<16x16xf32>
    %82 = arith.mulf %81, %80 : vector<16x16xf32>
    %83 = arith.addf %78, %82 : vector<16x16xf32>
    %c91 = arith.constant 91 : index
    %84 = memref.load %arg1[%c91] : memref<99xf32, #tpu.memory_space<smem>>
    %85 = vector.extract_strided_slice %53 {offsets = [6, 0], sizes = [16, 16], strides = [1, 1]} : vector<22x16xf32> to vector<16x16xf32>
    %86 = vector.broadcast %84 : f32 to vector<16x16xf32>
    %87 = arith.mulf %86, %85 : vector<16x16xf32>
    %88 = arith.addf %83, %87 : vector<16x16xf32>
    %c0_21 = arith.constant 0 : index
    %c0_22 = arith.constant 0 : index
    %c1_23 = arith.constant 1 : index
    %89 = vector.load %arg4[%c0_21, %c0_22, %c1_23] : memref<2x22x22xf32, #tpu.memory_space<vmem>>, vector<1x22x16xf32>
    %90 = vector.shape_cast %89 : vector<1x22x16xf32> to vector<22x16xf32>
    %c1_24 = arith.constant 1 : index
    %91 = memref.load %arg1[%c1_24] : memref<99xf32, #tpu.memory_space<smem>>
    %92 = vector.extract_strided_slice %90 {offsets = [0, 0], sizes = [16, 16], strides = [1, 1]} : vector<22x16xf32> to vector<16x16xf32>
    %93 = vector.broadcast %91 : f32 to vector<16x16xf32>
    %94 = arith.mulf %93, %92 : vector<16x16xf32>
    %95 = arith.addf %88, %94 : vector<16x16xf32>
    %c8 = arith.constant 8 : index
    %96 = memref.load %arg1[%c8] : memref<99xf32, #tpu.memory_space<smem>>
    %97 = vector.extract_strided_slice %90 {offsets = [1, 0], sizes = [16, 16], strides = [1, 1]} : vector<22x16xf32> to vector<16x16xf32>
    %98 = vector.broadcast %96 : f32 to vector<16x16xf32>
    %99 = arith.mulf %98, %97 : vector<16x16xf32>
    %100 = arith.addf %95, %99 : vector<16x16xf32>
    %c15 = arith.constant 15 : index
    %101 = memref.load %arg1[%c15] : memref<99xf32, #tpu.memory_space<smem>>
    %102 = vector.extract_strided_slice %90 {offsets = [2, 0], sizes = [16, 16], strides = [1, 1]} : vector<22x16xf32> to vector<16x16xf32>
    %103 = vector.broadcast %101 : f32 to vector<16x16xf32>
    %104 = arith.mulf %103, %102 : vector<16x16xf32>
    %105 = arith.addf %100, %104 : vector<16x16xf32>
    %c22 = arith.constant 22 : index
    %106 = memref.load %arg1[%c22] : memref<99xf32, #tpu.memory_space<smem>>
    %107 = vector.extract_strided_slice %90 {offsets = [3, 0], sizes = [16, 16], strides = [1, 1]} : vector<22x16xf32> to vector<16x16xf32>
    %108 = vector.broadcast %106 : f32 to vector<16x16xf32>
    %109 = arith.mulf %108, %107 : vector<16x16xf32>
    %110 = arith.addf %105, %109 : vector<16x16xf32>
    %c29 = arith.constant 29 : index
    %111 = memref.load %arg1[%c29] : memref<99xf32, #tpu.memory_space<smem>>
    %112 = vector.extract_strided_slice %90 {offsets = [4, 0], sizes = [16, 16], strides = [1, 1]} : vector<22x16xf32> to vector<16x16xf32>
    %113 = vector.broadcast %111 : f32 to vector<16x16xf32>
    %114 = arith.mulf %113, %112 : vector<16x16xf32>
    %115 = arith.addf %110, %114 : vector<16x16xf32>
    %c36 = arith.constant 36 : index
    %116 = memref.load %arg1[%c36] : memref<99xf32, #tpu.memory_space<smem>>
    %117 = vector.extract_strided_slice %90 {offsets = [5, 0], sizes = [16, 16], strides = [1, 1]} : vector<22x16xf32> to vector<16x16xf32>
    %118 = vector.broadcast %116 : f32 to vector<16x16xf32>
    %119 = arith.mulf %118, %117 : vector<16x16xf32>
    %120 = arith.addf %115, %119 : vector<16x16xf32>
    %c43 = arith.constant 43 : index
    %121 = memref.load %arg1[%c43] : memref<99xf32, #tpu.memory_space<smem>>
    %122 = vector.extract_strided_slice %90 {offsets = [6, 0], sizes = [16, 16], strides = [1, 1]} : vector<22x16xf32> to vector<16x16xf32>
    %123 = vector.broadcast %121 : f32 to vector<16x16xf32>
    %124 = arith.mulf %123, %122 : vector<16x16xf32>
    %125 = arith.addf %120, %124 : vector<16x16xf32>
    %c1_25 = arith.constant 1 : index
    %c0_26 = arith.constant 0 : index
    %c1_27 = arith.constant 1 : index
    %126 = vector.load %arg4[%c1_25, %c0_26, %c1_27] : memref<2x22x22xf32, #tpu.memory_space<vmem>>, vector<1x22x16xf32>
    %127 = vector.shape_cast %126 : vector<1x22x16xf32> to vector<22x16xf32>
    %c50 = arith.constant 50 : index
    %128 = memref.load %arg1[%c50] : memref<99xf32, #tpu.memory_space<smem>>
    %129 = vector.extract_strided_slice %127 {offsets = [0, 0], sizes = [16, 16], strides = [1, 1]} : vector<22x16xf32> to vector<16x16xf32>
    %130 = vector.broadcast %128 : f32 to vector<16x16xf32>
    %131 = arith.mulf %130, %129 : vector<16x16xf32>
    %132 = arith.addf %125, %131 : vector<16x16xf32>
    %c57 = arith.constant 57 : index
    %133 = memref.load %arg1[%c57] : memref<99xf32, #tpu.memory_space<smem>>
    %134 = vector.extract_strided_slice %127 {offsets = [1, 0], sizes = [16, 16], strides = [1, 1]} : vector<22x16xf32> to vector<16x16xf32>
    %135 = vector.broadcast %133 : f32 to vector<16x16xf32>
    %136 = arith.mulf %135, %134 : vector<16x16xf32>
    %137 = arith.addf %132, %136 : vector<16x16xf32>
    %c64 = arith.constant 64 : index
    %138 = memref.load %arg1[%c64] : memref<99xf32, #tpu.memory_space<smem>>
    %139 = vector.extract_strided_slice %127 {offsets = [2, 0], sizes = [16, 16], strides = [1, 1]} : vector<22x16xf32> to vector<16x16xf32>
    %140 = vector.broadcast %138 : f32 to vector<16x16xf32>
    %141 = arith.mulf %140, %139 : vector<16x16xf32>
    %142 = arith.addf %137, %141 : vector<16x16xf32>
    %c71 = arith.constant 71 : index
    %143 = memref.load %arg1[%c71] : memref<99xf32, #tpu.memory_space<smem>>
    %144 = vector.extract_strided_slice %127 {offsets = [3, 0], sizes = [16, 16], strides = [1, 1]} : vector<22x16xf32> to vector<16x16xf32>
    %145 = vector.broadcast %143 : f32 to vector<16x16xf32>
    %146 = arith.mulf %145, %144 : vector<16x16xf32>
    %147 = arith.addf %142, %146 : vector<16x16xf32>
    %c78 = arith.constant 78 : index
    %148 = memref.load %arg1[%c78] : memref<99xf32, #tpu.memory_space<smem>>
    %149 = vector.extract_strided_slice %127 {offsets = [4, 0], sizes = [16, 16], strides = [1, 1]} : vector<22x16xf32> to vector<16x16xf32>
    %150 = vector.broadcast %148 : f32 to vector<16x16xf32>
    %151 = arith.mulf %150, %149 : vector<16x16xf32>
    %152 = arith.addf %147, %151 : vector<16x16xf32>
    %c85 = arith.constant 85 : index
    %153 = memref.load %arg1[%c85] : memref<99xf32, #tpu.memory_space<smem>>
    %154 = vector.extract_strided_slice %127 {offsets = [5, 0], sizes = [16, 16], strides = [1, 1]} : vector<22x16xf32> to vector<16x16xf32>
    %155 = vector.broadcast %153 : f32 to vector<16x16xf32>
    %156 = arith.mulf %155, %154 : vector<16x16xf32>
    %157 = arith.addf %152, %156 : vector<16x16xf32>
    %c92 = arith.constant 92 : index
    %158 = memref.load %arg1[%c92] : memref<99xf32, #tpu.memory_space<smem>>
    %159 = vector.extract_strided_slice %127 {offsets = [6, 0], sizes = [16, 16], strides = [1, 1]} : vector<22x16xf32> to vector<16x16xf32>
    %160 = vector.broadcast %158 : f32 to vector<16x16xf32>
    %161 = arith.mulf %160, %159 : vector<16x16xf32>
    %162 = arith.addf %157, %161 : vector<16x16xf32>
    %c0_28 = arith.constant 0 : index
    %c0_29 = arith.constant 0 : index
    %c2 = arith.constant 2 : index
    %163 = vector.load %arg4[%c0_28, %c0_29, %c2] : memref<2x22x22xf32, #tpu.memory_space<vmem>>, vector<1x22x16xf32>
    %164 = vector.shape_cast %163 : vector<1x22x16xf32> to vector<22x16xf32>
    %c2_30 = arith.constant 2 : index
    %165 = memref.load %arg1[%c2_30] : memref<99xf32, #tpu.memory_space<smem>>
    %166 = vector.extract_strided_slice %164 {offsets = [0, 0], sizes = [16, 16], strides = [1, 1]} : vector<22x16xf32> to vector<16x16xf32>
    %167 = vector.broadcast %165 : f32 to vector<16x16xf32>
    %168 = arith.mulf %167, %166 : vector<16x16xf32>
    %169 = arith.addf %162, %168 : vector<16x16xf32>
    %c9 = arith.constant 9 : index
    %170 = memref.load %arg1[%c9] : memref<99xf32, #tpu.memory_space<smem>>
    %171 = vector.extract_strided_slice %164 {offsets = [1, 0], sizes = [16, 16], strides = [1, 1]} : vector<22x16xf32> to vector<16x16xf32>
    %172 = vector.broadcast %170 : f32 to vector<16x16xf32>
    %173 = arith.mulf %172, %171 : vector<16x16xf32>
    %174 = arith.addf %169, %173 : vector<16x16xf32>
    %c16 = arith.constant 16 : index
    %175 = memref.load %arg1[%c16] : memref<99xf32, #tpu.memory_space<smem>>
    %176 = vector.extract_strided_slice %164 {offsets = [2, 0], sizes = [16, 16], strides = [1, 1]} : vector<22x16xf32> to vector<16x16xf32>
    %177 = vector.broadcast %175 : f32 to vector<16x16xf32>
    %178 = arith.mulf %177, %176 : vector<16x16xf32>
    %179 = arith.addf %174, %178 : vector<16x16xf32>
    %c23 = arith.constant 23 : index
    %180 = memref.load %arg1[%c23] : memref<99xf32, #tpu.memory_space<smem>>
    %181 = vector.extract_strided_slice %164 {offsets = [3, 0], sizes = [16, 16], strides = [1, 1]} : vector<22x16xf32> to vector<16x16xf32>
    %182 = vector.broadcast %180 : f32 to vector<16x16xf32>
    %183 = arith.mulf %182, %181 : vector<16x16xf32>
    %184 = arith.addf %179, %183 : vector<16x16xf32>
    %c30 = arith.constant 30 : index
    %185 = memref.load %arg1[%c30] : memref<99xf32, #tpu.memory_space<smem>>
    %186 = vector.extract_strided_slice %164 {offsets = [4, 0], sizes = [16, 16], strides = [1, 1]} : vector<22x16xf32> to vector<16x16xf32>
    %187 = vector.broadcast %185 : f32 to vector<16x16xf32>
    %188 = arith.mulf %187, %186 : vector<16x16xf32>
    %189 = arith.addf %184, %188 : vector<16x16xf32>
    %c37 = arith.constant 37 : index
    %190 = memref.load %arg1[%c37] : memref<99xf32, #tpu.memory_space<smem>>
    %191 = vector.extract_strided_slice %164 {offsets = [5, 0], sizes = [16, 16], strides = [1, 1]} : vector<22x16xf32> to vector<16x16xf32>
    %192 = vector.broadcast %190 : f32 to vector<16x16xf32>
    %193 = arith.mulf %192, %191 : vector<16x16xf32>
    %194 = arith.addf %189, %193 : vector<16x16xf32>
    %c44 = arith.constant 44 : index
    %195 = memref.load %arg1[%c44] : memref<99xf32, #tpu.memory_space<smem>>
    %196 = vector.extract_strided_slice %164 {offsets = [6, 0], sizes = [16, 16], strides = [1, 1]} : vector<22x16xf32> to vector<16x16xf32>
    %197 = vector.broadcast %195 : f32 to vector<16x16xf32>
    %198 = arith.mulf %197, %196 : vector<16x16xf32>
    %199 = arith.addf %194, %198 : vector<16x16xf32>
    %c1_31 = arith.constant 1 : index
    %c0_32 = arith.constant 0 : index
    %c2_33 = arith.constant 2 : index
    %200 = vector.load %arg4[%c1_31, %c0_32, %c2_33] : memref<2x22x22xf32, #tpu.memory_space<vmem>>, vector<1x22x16xf32>
    %201 = vector.shape_cast %200 : vector<1x22x16xf32> to vector<22x16xf32>
    %c51 = arith.constant 51 : index
    %202 = memref.load %arg1[%c51] : memref<99xf32, #tpu.memory_space<smem>>
    %203 = vector.extract_strided_slice %201 {offsets = [0, 0], sizes = [16, 16], strides = [1, 1]} : vector<22x16xf32> to vector<16x16xf32>
    %204 = vector.broadcast %202 : f32 to vector<16x16xf32>
    %205 = arith.mulf %204, %203 : vector<16x16xf32>
    %206 = arith.addf %199, %205 : vector<16x16xf32>
    %c58 = arith.constant 58 : index
    %207 = memref.load %arg1[%c58] : memref<99xf32, #tpu.memory_space<smem>>
    %208 = vector.extract_strided_slice %201 {offsets = [1, 0], sizes = [16, 16], strides = [1, 1]} : vector<22x16xf32> to vector<16x16xf32>
    %209 = vector.broadcast %207 : f32 to vector<16x16xf32>
    %210 = arith.mulf %209, %208 : vector<16x16xf32>
    %211 = arith.addf %206, %210 : vector<16x16xf32>
    %c65 = arith.constant 65 : index
    %212 = memref.load %arg1[%c65] : memref<99xf32, #tpu.memory_space<smem>>
    %213 = vector.extract_strided_slice %201 {offsets = [2, 0], sizes = [16, 16], strides = [1, 1]} : vector<22x16xf32> to vector<16x16xf32>
    %214 = vector.broadcast %212 : f32 to vector<16x16xf32>
    %215 = arith.mulf %214, %213 : vector<16x16xf32>
    %216 = arith.addf %211, %215 : vector<16x16xf32>
    %c72 = arith.constant 72 : index
    %217 = memref.load %arg1[%c72] : memref<99xf32, #tpu.memory_space<smem>>
    %218 = vector.extract_strided_slice %201 {offsets = [3, 0], sizes = [16, 16], strides = [1, 1]} : vector<22x16xf32> to vector<16x16xf32>
    %219 = vector.broadcast %217 : f32 to vector<16x16xf32>
    %220 = arith.mulf %219, %218 : vector<16x16xf32>
    %221 = arith.addf %216, %220 : vector<16x16xf32>
    %c79 = arith.constant 79 : index
    %222 = memref.load %arg1[%c79] : memref<99xf32, #tpu.memory_space<smem>>
    %223 = vector.extract_strided_slice %201 {offsets = [4, 0], sizes = [16, 16], strides = [1, 1]} : vector<22x16xf32> to vector<16x16xf32>
    %224 = vector.broadcast %222 : f32 to vector<16x16xf32>
    %225 = arith.mulf %224, %223 : vector<16x16xf32>
    %226 = arith.addf %221, %225 : vector<16x16xf32>
    %c86 = arith.constant 86 : index
    %227 = memref.load %arg1[%c86] : memref<99xf32, #tpu.memory_space<smem>>
    %228 = vector.extract_strided_slice %201 {offsets = [5, 0], sizes = [16, 16], strides = [1, 1]} : vector<22x16xf32> to vector<16x16xf32>
    %229 = vector.broadcast %227 : f32 to vector<16x16xf32>
    %230 = arith.mulf %229, %228 : vector<16x16xf32>
    %231 = arith.addf %226, %230 : vector<16x16xf32>
    %c93 = arith.constant 93 : index
    %232 = memref.load %arg1[%c93] : memref<99xf32, #tpu.memory_space<smem>>
    %233 = vector.extract_strided_slice %201 {offsets = [6, 0], sizes = [16, 16], strides = [1, 1]} : vector<22x16xf32> to vector<16x16xf32>
    %234 = vector.broadcast %232 : f32 to vector<16x16xf32>
    %235 = arith.mulf %234, %233 : vector<16x16xf32>
    %236 = arith.addf %231, %235 : vector<16x16xf32>
    %c0_34 = arith.constant 0 : index
    %c0_35 = arith.constant 0 : index
    %c3_36 = arith.constant 3 : index
    %237 = vector.load %arg4[%c0_34, %c0_35, %c3_36] : memref<2x22x22xf32, #tpu.memory_space<vmem>>, vector<1x22x16xf32>
    %238 = vector.shape_cast %237 : vector<1x22x16xf32> to vector<22x16xf32>
    %c3_37 = arith.constant 3 : index
    %239 = memref.load %arg1[%c3_37] : memref<99xf32, #tpu.memory_space<smem>>
    %240 = vector.extract_strided_slice %238 {offsets = [0, 0], sizes = [16, 16], strides = [1, 1]} : vector<22x16xf32> to vector<16x16xf32>
    %241 = vector.broadcast %239 : f32 to vector<16x16xf32>
    %242 = arith.mulf %241, %240 : vector<16x16xf32>
    %243 = arith.addf %236, %242 : vector<16x16xf32>
    %c10 = arith.constant 10 : index
    %244 = memref.load %arg1[%c10] : memref<99xf32, #tpu.memory_space<smem>>
    %245 = vector.extract_strided_slice %238 {offsets = [1, 0], sizes = [16, 16], strides = [1, 1]} : vector<22x16xf32> to vector<16x16xf32>
    %246 = vector.broadcast %244 : f32 to vector<16x16xf32>
    %247 = arith.mulf %246, %245 : vector<16x16xf32>
    %248 = arith.addf %243, %247 : vector<16x16xf32>
    %c17 = arith.constant 17 : index
    %249 = memref.load %arg1[%c17] : memref<99xf32, #tpu.memory_space<smem>>
    %250 = vector.extract_strided_slice %238 {offsets = [2, 0], sizes = [16, 16], strides = [1, 1]} : vector<22x16xf32> to vector<16x16xf32>
    %251 = vector.broadcast %249 : f32 to vector<16x16xf32>
    %252 = arith.mulf %251, %250 : vector<16x16xf32>
    %253 = arith.addf %248, %252 : vector<16x16xf32>
    %c24 = arith.constant 24 : index
    %254 = memref.load %arg1[%c24] : memref<99xf32, #tpu.memory_space<smem>>
    %255 = vector.extract_strided_slice %238 {offsets = [3, 0], sizes = [16, 16], strides = [1, 1]} : vector<22x16xf32> to vector<16x16xf32>
    %256 = vector.broadcast %254 : f32 to vector<16x16xf32>
    %257 = arith.mulf %256, %255 : vector<16x16xf32>
    %258 = arith.addf %253, %257 : vector<16x16xf32>
    %c31 = arith.constant 31 : index
    %259 = memref.load %arg1[%c31] : memref<99xf32, #tpu.memory_space<smem>>
    %260 = vector.extract_strided_slice %238 {offsets = [4, 0], sizes = [16, 16], strides = [1, 1]} : vector<22x16xf32> to vector<16x16xf32>
    %261 = vector.broadcast %259 : f32 to vector<16x16xf32>
    %262 = arith.mulf %261, %260 : vector<16x16xf32>
    %263 = arith.addf %258, %262 : vector<16x16xf32>
    %c38 = arith.constant 38 : index
    %264 = memref.load %arg1[%c38] : memref<99xf32, #tpu.memory_space<smem>>
    %265 = vector.extract_strided_slice %238 {offsets = [5, 0], sizes = [16, 16], strides = [1, 1]} : vector<22x16xf32> to vector<16x16xf32>
    %266 = vector.broadcast %264 : f32 to vector<16x16xf32>
    %267 = arith.mulf %266, %265 : vector<16x16xf32>
    %268 = arith.addf %263, %267 : vector<16x16xf32>
    %c45 = arith.constant 45 : index
    %269 = memref.load %arg1[%c45] : memref<99xf32, #tpu.memory_space<smem>>
    %270 = vector.extract_strided_slice %238 {offsets = [6, 0], sizes = [16, 16], strides = [1, 1]} : vector<22x16xf32> to vector<16x16xf32>
    %271 = vector.broadcast %269 : f32 to vector<16x16xf32>
    %272 = arith.mulf %271, %270 : vector<16x16xf32>
    %273 = arith.addf %268, %272 : vector<16x16xf32>
    %c1_38 = arith.constant 1 : index
    %c0_39 = arith.constant 0 : index
    %c3_40 = arith.constant 3 : index
    %274 = vector.load %arg4[%c1_38, %c0_39, %c3_40] : memref<2x22x22xf32, #tpu.memory_space<vmem>>, vector<1x22x16xf32>
    %275 = vector.shape_cast %274 : vector<1x22x16xf32> to vector<22x16xf32>
    %c52 = arith.constant 52 : index
    %276 = memref.load %arg1[%c52] : memref<99xf32, #tpu.memory_space<smem>>
    %277 = vector.extract_strided_slice %275 {offsets = [0, 0], sizes = [16, 16], strides = [1, 1]} : vector<22x16xf32> to vector<16x16xf32>
    %278 = vector.broadcast %276 : f32 to vector<16x16xf32>
    %279 = arith.mulf %278, %277 : vector<16x16xf32>
    %280 = arith.addf %273, %279 : vector<16x16xf32>
    %c59 = arith.constant 59 : index
    %281 = memref.load %arg1[%c59] : memref<99xf32, #tpu.memory_space<smem>>
    %282 = vector.extract_strided_slice %275 {offsets = [1, 0], sizes = [16, 16], strides = [1, 1]} : vector<22x16xf32> to vector<16x16xf32>
    %283 = vector.broadcast %281 : f32 to vector<16x16xf32>
    %284 = arith.mulf %283, %282 : vector<16x16xf32>
    %285 = arith.addf %280, %284 : vector<16x16xf32>
    %c66 = arith.constant 66 : index
    %286 = memref.load %arg1[%c66] : memref<99xf32, #tpu.memory_space<smem>>
    %287 = vector.extract_strided_slice %275 {offsets = [2, 0], sizes = [16, 16], strides = [1, 1]} : vector<22x16xf32> to vector<16x16xf32>
    %288 = vector.broadcast %286 : f32 to vector<16x16xf32>
    %289 = arith.mulf %288, %287 : vector<16x16xf32>
    %290 = arith.addf %285, %289 : vector<16x16xf32>
    %c73 = arith.constant 73 : index
    %291 = memref.load %arg1[%c73] : memref<99xf32, #tpu.memory_space<smem>>
    %292 = vector.extract_strided_slice %275 {offsets = [3, 0], sizes = [16, 16], strides = [1, 1]} : vector<22x16xf32> to vector<16x16xf32>
    %293 = vector.broadcast %291 : f32 to vector<16x16xf32>
    %294 = arith.mulf %293, %292 : vector<16x16xf32>
    %295 = arith.addf %290, %294 : vector<16x16xf32>
    %c80 = arith.constant 80 : index
    %296 = memref.load %arg1[%c80] : memref<99xf32, #tpu.memory_space<smem>>
    %297 = vector.extract_strided_slice %275 {offsets = [4, 0], sizes = [16, 16], strides = [1, 1]} : vector<22x16xf32> to vector<16x16xf32>
    %298 = vector.broadcast %296 : f32 to vector<16x16xf32>
    %299 = arith.mulf %298, %297 : vector<16x16xf32>
    %300 = arith.addf %295, %299 : vector<16x16xf32>
    %c87 = arith.constant 87 : index
    %301 = memref.load %arg1[%c87] : memref<99xf32, #tpu.memory_space<smem>>
    %302 = vector.extract_strided_slice %275 {offsets = [5, 0], sizes = [16, 16], strides = [1, 1]} : vector<22x16xf32> to vector<16x16xf32>
    %303 = vector.broadcast %301 : f32 to vector<16x16xf32>
    %304 = arith.mulf %303, %302 : vector<16x16xf32>
    %305 = arith.addf %300, %304 : vector<16x16xf32>
    %c94 = arith.constant 94 : index
    %306 = memref.load %arg1[%c94] : memref<99xf32, #tpu.memory_space<smem>>
    %307 = vector.extract_strided_slice %275 {offsets = [6, 0], sizes = [16, 16], strides = [1, 1]} : vector<22x16xf32> to vector<16x16xf32>
    %308 = vector.broadcast %306 : f32 to vector<16x16xf32>
    %309 = arith.mulf %308, %307 : vector<16x16xf32>
    %310 = arith.addf %305, %309 : vector<16x16xf32>
    %c0_41 = arith.constant 0 : index
    %c0_42 = arith.constant 0 : index
    %c4 = arith.constant 4 : index
    %311 = vector.load %arg4[%c0_41, %c0_42, %c4] : memref<2x22x22xf32, #tpu.memory_space<vmem>>, vector<1x22x16xf32>
    %312 = vector.shape_cast %311 : vector<1x22x16xf32> to vector<22x16xf32>
    %c4_43 = arith.constant 4 : index
    %313 = memref.load %arg1[%c4_43] : memref<99xf32, #tpu.memory_space<smem>>
    %314 = vector.extract_strided_slice %312 {offsets = [0, 0], sizes = [16, 16], strides = [1, 1]} : vector<22x16xf32> to vector<16x16xf32>
    %315 = vector.broadcast %313 : f32 to vector<16x16xf32>
    %316 = arith.mulf %315, %314 : vector<16x16xf32>
    %317 = arith.addf %310, %316 : vector<16x16xf32>
    %c11 = arith.constant 11 : index
    %318 = memref.load %arg1[%c11] : memref<99xf32, #tpu.memory_space<smem>>
    %319 = vector.extract_strided_slice %312 {offsets = [1, 0], sizes = [16, 16], strides = [1, 1]} : vector<22x16xf32> to vector<16x16xf32>
    %320 = vector.broadcast %318 : f32 to vector<16x16xf32>
    %321 = arith.mulf %320, %319 : vector<16x16xf32>
    %322 = arith.addf %317, %321 : vector<16x16xf32>
    %c18 = arith.constant 18 : index
    %323 = memref.load %arg1[%c18] : memref<99xf32, #tpu.memory_space<smem>>
    %324 = vector.extract_strided_slice %312 {offsets = [2, 0], sizes = [16, 16], strides = [1, 1]} : vector<22x16xf32> to vector<16x16xf32>
    %325 = vector.broadcast %323 : f32 to vector<16x16xf32>
    %326 = arith.mulf %325, %324 : vector<16x16xf32>
    %327 = arith.addf %322, %326 : vector<16x16xf32>
    %c25 = arith.constant 25 : index
    %328 = memref.load %arg1[%c25] : memref<99xf32, #tpu.memory_space<smem>>
    %329 = vector.extract_strided_slice %312 {offsets = [3, 0], sizes = [16, 16], strides = [1, 1]} : vector<22x16xf32> to vector<16x16xf32>
    %330 = vector.broadcast %328 : f32 to vector<16x16xf32>
    %331 = arith.mulf %330, %329 : vector<16x16xf32>
    %332 = arith.addf %327, %331 : vector<16x16xf32>
    %c32 = arith.constant 32 : index
    %333 = memref.load %arg1[%c32] : memref<99xf32, #tpu.memory_space<smem>>
    %334 = vector.extract_strided_slice %312 {offsets = [4, 0], sizes = [16, 16], strides = [1, 1]} : vector<22x16xf32> to vector<16x16xf32>
    %335 = vector.broadcast %333 : f32 to vector<16x16xf32>
    %336 = arith.mulf %335, %334 : vector<16x16xf32>
    %337 = arith.addf %332, %336 : vector<16x16xf32>
    %c39 = arith.constant 39 : index
    %338 = memref.load %arg1[%c39] : memref<99xf32, #tpu.memory_space<smem>>
    %339 = vector.extract_strided_slice %312 {offsets = [5, 0], sizes = [16, 16], strides = [1, 1]} : vector<22x16xf32> to vector<16x16xf32>
    %340 = vector.broadcast %338 : f32 to vector<16x16xf32>
    %341 = arith.mulf %340, %339 : vector<16x16xf32>
    %342 = arith.addf %337, %341 : vector<16x16xf32>
    %c46 = arith.constant 46 : index
    %343 = memref.load %arg1[%c46] : memref<99xf32, #tpu.memory_space<smem>>
    %344 = vector.extract_strided_slice %312 {offsets = [6, 0], sizes = [16, 16], strides = [1, 1]} : vector<22x16xf32> to vector<16x16xf32>
    %345 = vector.broadcast %343 : f32 to vector<16x16xf32>
    %346 = arith.mulf %345, %344 : vector<16x16xf32>
    %347 = arith.addf %342, %346 : vector<16x16xf32>
    %c1_44 = arith.constant 1 : index
    %c0_45 = arith.constant 0 : index
    %c4_46 = arith.constant 4 : index
    %348 = vector.load %arg4[%c1_44, %c0_45, %c4_46] : memref<2x22x22xf32, #tpu.memory_space<vmem>>, vector<1x22x16xf32>
    %349 = vector.shape_cast %348 : vector<1x22x16xf32> to vector<22x16xf32>
    %c53 = arith.constant 53 : index
    %350 = memref.load %arg1[%c53] : memref<99xf32, #tpu.memory_space<smem>>
    %351 = vector.extract_strided_slice %349 {offsets = [0, 0], sizes = [16, 16], strides = [1, 1]} : vector<22x16xf32> to vector<16x16xf32>
    %352 = vector.broadcast %350 : f32 to vector<16x16xf32>
    %353 = arith.mulf %352, %351 : vector<16x16xf32>
    %354 = arith.addf %347, %353 : vector<16x16xf32>
    %c60 = arith.constant 60 : index
    %355 = memref.load %arg1[%c60] : memref<99xf32, #tpu.memory_space<smem>>
    %356 = vector.extract_strided_slice %349 {offsets = [1, 0], sizes = [16, 16], strides = [1, 1]} : vector<22x16xf32> to vector<16x16xf32>
    %357 = vector.broadcast %355 : f32 to vector<16x16xf32>
    %358 = arith.mulf %357, %356 : vector<16x16xf32>
    %359 = arith.addf %354, %358 : vector<16x16xf32>
    %c67 = arith.constant 67 : index
    %360 = memref.load %arg1[%c67] : memref<99xf32, #tpu.memory_space<smem>>
    %361 = vector.extract_strided_slice %349 {offsets = [2, 0], sizes = [16, 16], strides = [1, 1]} : vector<22x16xf32> to vector<16x16xf32>
    %362 = vector.broadcast %360 : f32 to vector<16x16xf32>
    %363 = arith.mulf %362, %361 : vector<16x16xf32>
    %364 = arith.addf %359, %363 : vector<16x16xf32>
    %c74 = arith.constant 74 : index
    %365 = memref.load %arg1[%c74] : memref<99xf32, #tpu.memory_space<smem>>
    %366 = vector.extract_strided_slice %349 {offsets = [3, 0], sizes = [16, 16], strides = [1, 1]} : vector<22x16xf32> to vector<16x16xf32>
    %367 = vector.broadcast %365 : f32 to vector<16x16xf32>
    %368 = arith.mulf %367, %366 : vector<16x16xf32>
    %369 = arith.addf %364, %368 : vector<16x16xf32>
    %c81 = arith.constant 81 : index
    %370 = memref.load %arg1[%c81] : memref<99xf32, #tpu.memory_space<smem>>
    %371 = vector.extract_strided_slice %349 {offsets = [4, 0], sizes = [16, 16], strides = [1, 1]} : vector<22x16xf32> to vector<16x16xf32>
    %372 = vector.broadcast %370 : f32 to vector<16x16xf32>
    %373 = arith.mulf %372, %371 : vector<16x16xf32>
    %374 = arith.addf %369, %373 : vector<16x16xf32>
    %c88 = arith.constant 88 : index
    %375 = memref.load %arg1[%c88] : memref<99xf32, #tpu.memory_space<smem>>
    %376 = vector.extract_strided_slice %349 {offsets = [5, 0], sizes = [16, 16], strides = [1, 1]} : vector<22x16xf32> to vector<16x16xf32>
    %377 = vector.broadcast %375 : f32 to vector<16x16xf32>
    %378 = arith.mulf %377, %376 : vector<16x16xf32>
    %379 = arith.addf %374, %378 : vector<16x16xf32>
    %c95 = arith.constant 95 : index
    %380 = memref.load %arg1[%c95] : memref<99xf32, #tpu.memory_space<smem>>
    %381 = vector.extract_strided_slice %349 {offsets = [6, 0], sizes = [16, 16], strides = [1, 1]} : vector<22x16xf32> to vector<16x16xf32>
    %382 = vector.broadcast %380 : f32 to vector<16x16xf32>
    %383 = arith.mulf %382, %381 : vector<16x16xf32>
    %384 = arith.addf %379, %383 : vector<16x16xf32>
    %c0_47 = arith.constant 0 : index
    %c0_48 = arith.constant 0 : index
    %c5 = arith.constant 5 : index
    %385 = vector.load %arg4[%c0_47, %c0_48, %c5] : memref<2x22x22xf32, #tpu.memory_space<vmem>>, vector<1x22x16xf32>
    %386 = vector.shape_cast %385 : vector<1x22x16xf32> to vector<22x16xf32>
    %c5_49 = arith.constant 5 : index
    %387 = memref.load %arg1[%c5_49] : memref<99xf32, #tpu.memory_space<smem>>
    %388 = vector.extract_strided_slice %386 {offsets = [0, 0], sizes = [16, 16], strides = [1, 1]} : vector<22x16xf32> to vector<16x16xf32>
    %389 = vector.broadcast %387 : f32 to vector<16x16xf32>
    %390 = arith.mulf %389, %388 : vector<16x16xf32>
    %391 = arith.addf %384, %390 : vector<16x16xf32>
    %c12 = arith.constant 12 : index
    %392 = memref.load %arg1[%c12] : memref<99xf32, #tpu.memory_space<smem>>
    %393 = vector.extract_strided_slice %386 {offsets = [1, 0], sizes = [16, 16], strides = [1, 1]} : vector<22x16xf32> to vector<16x16xf32>
    %394 = vector.broadcast %392 : f32 to vector<16x16xf32>
    %395 = arith.mulf %394, %393 : vector<16x16xf32>
    %396 = arith.addf %391, %395 : vector<16x16xf32>
    %c19 = arith.constant 19 : index
    %397 = memref.load %arg1[%c19] : memref<99xf32, #tpu.memory_space<smem>>
    %398 = vector.extract_strided_slice %386 {offsets = [2, 0], sizes = [16, 16], strides = [1, 1]} : vector<22x16xf32> to vector<16x16xf32>
    %399 = vector.broadcast %397 : f32 to vector<16x16xf32>
    %400 = arith.mulf %399, %398 : vector<16x16xf32>
    %401 = arith.addf %396, %400 : vector<16x16xf32>
    %c26 = arith.constant 26 : index
    %402 = memref.load %arg1[%c26] : memref<99xf32, #tpu.memory_space<smem>>
    %403 = vector.extract_strided_slice %386 {offsets = [3, 0], sizes = [16, 16], strides = [1, 1]} : vector<22x16xf32> to vector<16x16xf32>
    %404 = vector.broadcast %402 : f32 to vector<16x16xf32>
    %405 = arith.mulf %404, %403 : vector<16x16xf32>
    %406 = arith.addf %401, %405 : vector<16x16xf32>
    %c33 = arith.constant 33 : index
    %407 = memref.load %arg1[%c33] : memref<99xf32, #tpu.memory_space<smem>>
    %408 = vector.extract_strided_slice %386 {offsets = [4, 0], sizes = [16, 16], strides = [1, 1]} : vector<22x16xf32> to vector<16x16xf32>
    %409 = vector.broadcast %407 : f32 to vector<16x16xf32>
    %410 = arith.mulf %409, %408 : vector<16x16xf32>
    %411 = arith.addf %406, %410 : vector<16x16xf32>
    %c40 = arith.constant 40 : index
    %412 = memref.load %arg1[%c40] : memref<99xf32, #tpu.memory_space<smem>>
    %413 = vector.extract_strided_slice %386 {offsets = [5, 0], sizes = [16, 16], strides = [1, 1]} : vector<22x16xf32> to vector<16x16xf32>
    %414 = vector.broadcast %412 : f32 to vector<16x16xf32>
    %415 = arith.mulf %414, %413 : vector<16x16xf32>
    %416 = arith.addf %411, %415 : vector<16x16xf32>
    %c47 = arith.constant 47 : index
    %417 = memref.load %arg1[%c47] : memref<99xf32, #tpu.memory_space<smem>>
    %418 = vector.extract_strided_slice %386 {offsets = [6, 0], sizes = [16, 16], strides = [1, 1]} : vector<22x16xf32> to vector<16x16xf32>
    %419 = vector.broadcast %417 : f32 to vector<16x16xf32>
    %420 = arith.mulf %419, %418 : vector<16x16xf32>
    %421 = arith.addf %416, %420 : vector<16x16xf32>
    %c1_50 = arith.constant 1 : index
    %c0_51 = arith.constant 0 : index
    %c5_52 = arith.constant 5 : index
    %422 = vector.load %arg4[%c1_50, %c0_51, %c5_52] : memref<2x22x22xf32, #tpu.memory_space<vmem>>, vector<1x22x16xf32>
    %423 = vector.shape_cast %422 : vector<1x22x16xf32> to vector<22x16xf32>
    %c54 = arith.constant 54 : index
    %424 = memref.load %arg1[%c54] : memref<99xf32, #tpu.memory_space<smem>>
    %425 = vector.extract_strided_slice %423 {offsets = [0, 0], sizes = [16, 16], strides = [1, 1]} : vector<22x16xf32> to vector<16x16xf32>
    %426 = vector.broadcast %424 : f32 to vector<16x16xf32>
    %427 = arith.mulf %426, %425 : vector<16x16xf32>
    %428 = arith.addf %421, %427 : vector<16x16xf32>
    %c61 = arith.constant 61 : index
    %429 = memref.load %arg1[%c61] : memref<99xf32, #tpu.memory_space<smem>>
    %430 = vector.extract_strided_slice %423 {offsets = [1, 0], sizes = [16, 16], strides = [1, 1]} : vector<22x16xf32> to vector<16x16xf32>
    %431 = vector.broadcast %429 : f32 to vector<16x16xf32>
    %432 = arith.mulf %431, %430 : vector<16x16xf32>
    %433 = arith.addf %428, %432 : vector<16x16xf32>
    %c68 = arith.constant 68 : index
    %434 = memref.load %arg1[%c68] : memref<99xf32, #tpu.memory_space<smem>>
    %435 = vector.extract_strided_slice %423 {offsets = [2, 0], sizes = [16, 16], strides = [1, 1]} : vector<22x16xf32> to vector<16x16xf32>
    %436 = vector.broadcast %434 : f32 to vector<16x16xf32>
    %437 = arith.mulf %436, %435 : vector<16x16xf32>
    %438 = arith.addf %433, %437 : vector<16x16xf32>
    %c75 = arith.constant 75 : index
    %439 = memref.load %arg1[%c75] : memref<99xf32, #tpu.memory_space<smem>>
    %440 = vector.extract_strided_slice %423 {offsets = [3, 0], sizes = [16, 16], strides = [1, 1]} : vector<22x16xf32> to vector<16x16xf32>
    %441 = vector.broadcast %439 : f32 to vector<16x16xf32>
    %442 = arith.mulf %441, %440 : vector<16x16xf32>
    %443 = arith.addf %438, %442 : vector<16x16xf32>
    %c82 = arith.constant 82 : index
    %444 = memref.load %arg1[%c82] : memref<99xf32, #tpu.memory_space<smem>>
    %445 = vector.extract_strided_slice %423 {offsets = [4, 0], sizes = [16, 16], strides = [1, 1]} : vector<22x16xf32> to vector<16x16xf32>
    %446 = vector.broadcast %444 : f32 to vector<16x16xf32>
    %447 = arith.mulf %446, %445 : vector<16x16xf32>
    %448 = arith.addf %443, %447 : vector<16x16xf32>
    %c89 = arith.constant 89 : index
    %449 = memref.load %arg1[%c89] : memref<99xf32, #tpu.memory_space<smem>>
    %450 = vector.extract_strided_slice %423 {offsets = [5, 0], sizes = [16, 16], strides = [1, 1]} : vector<22x16xf32> to vector<16x16xf32>
    %451 = vector.broadcast %449 : f32 to vector<16x16xf32>
    %452 = arith.mulf %451, %450 : vector<16x16xf32>
    %453 = arith.addf %448, %452 : vector<16x16xf32>
    %c96 = arith.constant 96 : index
    %454 = memref.load %arg1[%c96] : memref<99xf32, #tpu.memory_space<smem>>
    %455 = vector.extract_strided_slice %423 {offsets = [6, 0], sizes = [16, 16], strides = [1, 1]} : vector<22x16xf32> to vector<16x16xf32>
    %456 = vector.broadcast %454 : f32 to vector<16x16xf32>
    %457 = arith.mulf %456, %455 : vector<16x16xf32>
    %458 = arith.addf %453, %457 : vector<16x16xf32>
    %c0_53 = arith.constant 0 : index
    %c0_54 = arith.constant 0 : index
    %c6 = arith.constant 6 : index
    %459 = vector.load %arg4[%c0_53, %c0_54, %c6] : memref<2x22x22xf32, #tpu.memory_space<vmem>>, vector<1x22x16xf32>
    %460 = vector.shape_cast %459 : vector<1x22x16xf32> to vector<22x16xf32>
    %c6_55 = arith.constant 6 : index
    %461 = memref.load %arg1[%c6_55] : memref<99xf32, #tpu.memory_space<smem>>
    %462 = vector.extract_strided_slice %460 {offsets = [0, 0], sizes = [16, 16], strides = [1, 1]} : vector<22x16xf32> to vector<16x16xf32>
    %463 = vector.broadcast %461 : f32 to vector<16x16xf32>
    %464 = arith.mulf %463, %462 : vector<16x16xf32>
    %465 = arith.addf %458, %464 : vector<16x16xf32>
    %c13 = arith.constant 13 : index
    %466 = memref.load %arg1[%c13] : memref<99xf32, #tpu.memory_space<smem>>
    %467 = vector.extract_strided_slice %460 {offsets = [1, 0], sizes = [16, 16], strides = [1, 1]} : vector<22x16xf32> to vector<16x16xf32>
    %468 = vector.broadcast %466 : f32 to vector<16x16xf32>
    %469 = arith.mulf %468, %467 : vector<16x16xf32>
    %470 = arith.addf %465, %469 : vector<16x16xf32>
    %c20 = arith.constant 20 : index
    %471 = memref.load %arg1[%c20] : memref<99xf32, #tpu.memory_space<smem>>
    %472 = vector.extract_strided_slice %460 {offsets = [2, 0], sizes = [16, 16], strides = [1, 1]} : vector<22x16xf32> to vector<16x16xf32>
    %473 = vector.broadcast %471 : f32 to vector<16x16xf32>
    %474 = arith.mulf %473, %472 : vector<16x16xf32>
    %475 = arith.addf %470, %474 : vector<16x16xf32>
    %c27 = arith.constant 27 : index
    %476 = memref.load %arg1[%c27] : memref<99xf32, #tpu.memory_space<smem>>
    %477 = vector.extract_strided_slice %460 {offsets = [3, 0], sizes = [16, 16], strides = [1, 1]} : vector<22x16xf32> to vector<16x16xf32>
    %478 = vector.broadcast %476 : f32 to vector<16x16xf32>
    %479 = arith.mulf %478, %477 : vector<16x16xf32>
    %480 = arith.addf %475, %479 : vector<16x16xf32>
    %c34 = arith.constant 34 : index
    %481 = memref.load %arg1[%c34] : memref<99xf32, #tpu.memory_space<smem>>
    %482 = vector.extract_strided_slice %460 {offsets = [4, 0], sizes = [16, 16], strides = [1, 1]} : vector<22x16xf32> to vector<16x16xf32>
    %483 = vector.broadcast %481 : f32 to vector<16x16xf32>
    %484 = arith.mulf %483, %482 : vector<16x16xf32>
    %485 = arith.addf %480, %484 : vector<16x16xf32>
    %c41 = arith.constant 41 : index
    %486 = memref.load %arg1[%c41] : memref<99xf32, #tpu.memory_space<smem>>
    %487 = vector.extract_strided_slice %460 {offsets = [5, 0], sizes = [16, 16], strides = [1, 1]} : vector<22x16xf32> to vector<16x16xf32>
    %488 = vector.broadcast %486 : f32 to vector<16x16xf32>
    %489 = arith.mulf %488, %487 : vector<16x16xf32>
    %490 = arith.addf %485, %489 : vector<16x16xf32>
    %c48 = arith.constant 48 : index
    %491 = memref.load %arg1[%c48] : memref<99xf32, #tpu.memory_space<smem>>
    %492 = vector.extract_strided_slice %460 {offsets = [6, 0], sizes = [16, 16], strides = [1, 1]} : vector<22x16xf32> to vector<16x16xf32>
    %493 = vector.broadcast %491 : f32 to vector<16x16xf32>
    %494 = arith.mulf %493, %492 : vector<16x16xf32>
    %495 = arith.addf %490, %494 : vector<16x16xf32>
    %c1_56 = arith.constant 1 : index
    %c0_57 = arith.constant 0 : index
    %c6_58 = arith.constant 6 : index
    %496 = vector.load %arg4[%c1_56, %c0_57, %c6_58] : memref<2x22x22xf32, #tpu.memory_space<vmem>>, vector<1x22x16xf32>
    %497 = vector.shape_cast %496 : vector<1x22x16xf32> to vector<22x16xf32>
    %c55 = arith.constant 55 : index
    %498 = memref.load %arg1[%c55] : memref<99xf32, #tpu.memory_space<smem>>
    %499 = vector.extract_strided_slice %497 {offsets = [0, 0], sizes = [16, 16], strides = [1, 1]} : vector<22x16xf32> to vector<16x16xf32>
    %500 = vector.broadcast %498 : f32 to vector<16x16xf32>
    %501 = arith.mulf %500, %499 : vector<16x16xf32>
    %502 = arith.addf %495, %501 : vector<16x16xf32>
    %c62 = arith.constant 62 : index
    %503 = memref.load %arg1[%c62] : memref<99xf32, #tpu.memory_space<smem>>
    %504 = vector.extract_strided_slice %497 {offsets = [1, 0], sizes = [16, 16], strides = [1, 1]} : vector<22x16xf32> to vector<16x16xf32>
    %505 = vector.broadcast %503 : f32 to vector<16x16xf32>
    %506 = arith.mulf %505, %504 : vector<16x16xf32>
    %507 = arith.addf %502, %506 : vector<16x16xf32>
    %c69 = arith.constant 69 : index
    %508 = memref.load %arg1[%c69] : memref<99xf32, #tpu.memory_space<smem>>
    %509 = vector.extract_strided_slice %497 {offsets = [2, 0], sizes = [16, 16], strides = [1, 1]} : vector<22x16xf32> to vector<16x16xf32>
    %510 = vector.broadcast %508 : f32 to vector<16x16xf32>
    %511 = arith.mulf %510, %509 : vector<16x16xf32>
    %512 = arith.addf %507, %511 : vector<16x16xf32>
    %c76 = arith.constant 76 : index
    %513 = memref.load %arg1[%c76] : memref<99xf32, #tpu.memory_space<smem>>
    %514 = vector.extract_strided_slice %497 {offsets = [3, 0], sizes = [16, 16], strides = [1, 1]} : vector<22x16xf32> to vector<16x16xf32>
    %515 = vector.broadcast %513 : f32 to vector<16x16xf32>
    %516 = arith.mulf %515, %514 : vector<16x16xf32>
    %517 = arith.addf %512, %516 : vector<16x16xf32>
    %c83 = arith.constant 83 : index
    %518 = memref.load %arg1[%c83] : memref<99xf32, #tpu.memory_space<smem>>
    %519 = vector.extract_strided_slice %497 {offsets = [4, 0], sizes = [16, 16], strides = [1, 1]} : vector<22x16xf32> to vector<16x16xf32>
    %520 = vector.broadcast %518 : f32 to vector<16x16xf32>
    %521 = arith.mulf %520, %519 : vector<16x16xf32>
    %522 = arith.addf %517, %521 : vector<16x16xf32>
    %c90 = arith.constant 90 : index
    %523 = memref.load %arg1[%c90] : memref<99xf32, #tpu.memory_space<smem>>
    %524 = vector.extract_strided_slice %497 {offsets = [5, 0], sizes = [16, 16], strides = [1, 1]} : vector<22x16xf32> to vector<16x16xf32>
    %525 = vector.broadcast %523 : f32 to vector<16x16xf32>
    %526 = arith.mulf %525, %524 : vector<16x16xf32>
    %527 = arith.addf %522, %526 : vector<16x16xf32>
    %c97 = arith.constant 97 : index
    %528 = memref.load %arg1[%c97] : memref<99xf32, #tpu.memory_space<smem>>
    %529 = vector.extract_strided_slice %497 {offsets = [6, 0], sizes = [16, 16], strides = [1, 1]} : vector<22x16xf32> to vector<16x16xf32>
    %530 = vector.broadcast %528 : f32 to vector<16x16xf32>
    %531 = arith.mulf %530, %529 : vector<16x16xf32>
    %532 = arith.addf %527, %531 : vector<16x16xf32>
    %c98 = arith.constant 98 : index
    %533 = memref.load %arg1[%c98] : memref<99xf32, #tpu.memory_space<smem>>
    %534 = vector.broadcast %533 : f32 to vector<16x16xf32>
    %535 = arith.addf %532, %534 : vector<16x16xf32>
    %cst_59 = arith.constant 0.000000e+00 : f32
    %536 = vector.broadcast %cst_59 : f32 to vector<16x16xf32>
    %537 = arith.subf %536, %535 : vector<16x16xf32>
    %538 = math.exp %537 : vector<16x16xf32>
    %cst_60 = arith.constant 1.000000e+00 : f32
    %539 = vector.broadcast %cst_60 : f32 to vector<16x16xf32>
    %540 = arith.addf %539, %538 : vector<16x16xf32>
    %cst_61 = arith.constant 1.000000e+00 : f32
    %541 = vector.broadcast %cst_61 : f32 to vector<16x16xf32>
    %542 = arith.divf %541, %540 : vector<16x16xf32>
    %543 = vector.shape_cast %542 : vector<16x16xf32> to vector<1x16x16xf32>
    %544 = vector.broadcast %543 : vector<1x16x16xf32> to vector<4x16x16xf32>
    %545 = arith.mulf %1, %544 : vector<4x16x16xf32>
    %c0_62 = arith.constant 0 : index
    %c0_63 = arith.constant 0 : index
    %c0_64 = arith.constant 0 : index
    %c0_65 = arith.constant 0 : index
    %546 = vector.load %arg3[%c0_62, %c0_63, %c0_64, %c0_65] : memref<1x4x16x16xf32, #tpu.memory_space<vmem>>, vector<1x4x16x16xf32>
    %547 = vector.shape_cast %546 : vector<1x4x16x16xf32> to vector<4x16x16xf32>
    %548 = vector.shape_cast %545 : vector<4x16x16xf32> to vector<1x4x16x16xf32>
    tpu.vector_store %arg3[%c0_62, %c0_63, %c0_64, %c0_65], %548 {strides = array<i32>} : memref<1x4x16x16xf32, #tpu.memory_space<vmem>>, vector<1x4x16x16xf32>,
    return
  }
  func.func @transform_0(%arg0: i32) -> i32 {
    %c0_i32 = arith.constant 0 : i32
    %c0_i32_0 = arith.constant 0 : i32
    return %c0_i32 : i32
  }
  func.func @transform_1(%arg0: i32) -> (i32, i32, i32, i32) {
    %c0_i32 = arith.constant 0 : i32
    %c0_i32_0 = arith.constant 0 : i32
    %c0_i32_1 = arith.constant 0 : i32
    %c0_i32_2 = arith.constant 0 : i32
    return %arg0, %c0_i32, %c0_i32_0, %c0_i32_1 : i32, i32, i32, i32
  }
  func.func @transform_2(%arg0: i32) -> (i32, i32, i32, i32) {
    %c0_i32 = arith.constant 0 : i32
    %c0_i32_0 = arith.constant 0 : i32
    %c0_i32_1 = arith.constant 0 : i32
    %c0_i32_2 = arith.constant 0 : i32
    return %arg0, %c0_i32, %c0_i32_0, %c0_i32_1 : i32, i32, i32, i32
  }
}

</mosaic_0001>

<llo_original>
// kernel: tpu_custom_call.1
$region0: #{tpu_custom_call.1}
  #allocation0 [shape = 'u32[]', space=smem, size = 0x4, offset = 0x4, fixed_abs, tag = 'smem constant byte address 0x4 - core index']
  #allocation1 [shape = 'u32[144,128]{1,0:T(1,128)}', space=vmem, size = 0x12000, scoped, tag = 'internal scratch']
  #allocation2 [shape = 'f32[2,22,22]{2,1,0:T(8,128)}', space=vmem, size = 0x6000, scoped, tag = 'scratch operand']
  %s0 = inlined_call_operand.hbm [shape: f32[99], index: 0, kind: input, shape index: {}]
  %s1 = inlined_call_operand.hbm [shape: f32[2,4,16,16], index: 1, kind: input, shape index: {}]
  %s2 = inlined_call_operand.hbm [shape: f32[2,4,16,16], index: 2, kind: output, shape index: {}]
  %s3 = sld [smem:[#allocation0]]
  $region49: #{tpu_custom_call.1} parent=0
    _
  %s5 = ssub.s32 1, %s3
  %s6 = scalar_select 0, %s5, %s3
  $region1: #{tpu_custom_call.1} parent=0
    #allocation3 [shape = 'u8[512]{0}', space=smem, size = 0x200, scoped, tag = 'input window, operand 0, single buffered']
    #allocation4 [shape = 's32[2]{0}', space=sflag, size = 0x8, scoped, tag = 'scoped memory for tpu_custom_call.1']
    #allocation5 [shape = 's32[2]{0}', space=sflag, size = 0x8, scoped, tag = 'scoped memory for tpu_custom_call.1']
    #allocation6 [shape = 's32[2]{0}', space=sflag, size = 0x8, scoped, tag = 'scoped memory for tpu_custom_call.1']
    #allocation7 [shape = 'u8[65536]{0}', space=vmem, size = 0x10000, scoped, tag = 'input window, operand 1']
    #allocation8 [shape = 'u8[65536]{0}', space=vmem, size = 0x10000, scoped, tag = 'output window, operand 0']
    %7 = vsyncpa [#allocation6], 0
    %8 = vsyncpa [#allocation4], 0
    %s9 = scalar_lea.sflag [#allocation4], 1
    %10 = vsyncpa %s9, 0
    %11 = vsyncpa [#allocation5], 0
    %s12 = scalar_lea.sflag [#allocation5], 1
    %13 = vsyncpa %s12, 0
    loop: start=0, step=1, limit=4
    $region2: #{tpu_custom_call.1} parent=1 // loop_pre_header
      _
    $region3: #{tpu_custom_call.1} parent=1 // loop_header
      %s15 = sphi 0, %s19
      %p16 = scmp.ge.s32.totalorder %s15, 4
      %s23 = sphi 0, %s23
      %s25 = sphi 0, %s23
      %s26 = sphi 0, %s25
      %s40 = sphi 0, %s26
      %s46 = sphi 0, %s48
      %s49 = sphi 0, %s46
      %s50 = sphi 0, %s49
      %s66 = sphi 0, %s50
      %s72 = sphi 0, %s74
      %s75 = sphi 0, %s72
      %s76 = sphi 0, %s75
      %s92 = sphi 0, %s76
    $region4: #{tpu_custom_call.1} parent=1 // loop_header_branch
      %18 = sbr.rel (%p16) target = $region8
    $region5: #{tpu_custom_call.1} parent=1 // loop_body
      %s20 = ssub.s32 %s15, 1
      %s21 = ssub.s32 %s15, 2
      %s22 = sadd.s32 %s15, 1
      %s24 = sadd.s32 %s23, 1
      %p27 = scmp.eq.s32.totalorder %s15, 1
      %p28 = scmp.ne.s32.totalorder %s23, %s25
      %p29 = scmp.eq.s32.totalorder %s15, 0
      %p30 = por %p28, %p29
      %p31 = scmp.ne.s32.totalorder %s23, %s25
      %p32 = scmp.eq.s32.totalorder %s20, 1
      %p33 = por %p31, %p32
      %p34 = scmp.ne.s32.totalorder %s25, %s26
      %p35 = scmp.eq.s32.totalorder %s20, 0
      %p36 = por %p34, %p35
      %p37 = scmp.ne.s32.totalorder %s25, %s26
      %p38 = scmp.eq.s32.totalorder %s21, 1
      %p39 = por %p37, %p38
      %p41 = scmp.ne.s32.totalorder %s26, %s40
      %p42 = scmp.eq.s32.totalorder %s21, 0
      %p43 = por %p41, %p42
      %s44 = ssub.s32 %s15, %s22
      %p45 = scmp.eq.s32.totalorder %s44, 0
      %s47 = sadd.s32 %s46, 1
      %s48 = scalar_select %p45, %s46, %s47
      %p51 = pneg %p45
      %p52 = scmp.eq.s32.totalorder %s15, 1
      %p53 = por %p51, %p52
      %p54 = scmp.ne.s32.totalorder %s46, %s49
      %p55 = scmp.eq.s32.totalorder %s15, 0
      %p56 = por %p54, %p55
      %p57 = scmp.ne.s32.totalorder %s46, %s49
      %p58 = scmp.eq.s32.totalorder %s20, 1
      %p59 = por %p57, %p58
      %p60 = scmp.ne.s32.totalorder %s49, %s50
      %p61 = scmp.eq.s32.totalorder %s20, 0
      %p62 = por %p60, %p61
      %p63 = scmp.ne.s32.totalorder %s49, %s50
      %p64 = scmp.eq.s32.totalorder %s21, 1
      %p65 = por %p63, %p64
      %p67 = scmp.ne.s32.totalorder %s50, %s66
      %p68 = scmp.eq.s32.totalorder %s21, 0
      %p69 = por %p67, %p68
      %s70 = ssub.s32 %s15, %s22
      %p71 = scmp.eq.s32.totalorder %s70, 0
      %s73 = sadd.s32 %s72, 1
      %s74 = scalar_select %p71, %s72, %s73
      %p77 = pneg %p71
      %p78 = scmp.eq.s32.totalorder %s15, 1
      %p79 = por %p77, %p78
      %p80 = scmp.ne.s32.totalorder %s72, %s75
      %p81 = scmp.eq.s32.totalorder %s15, 0
      %p82 = por %p80, %p81
      %p83 = scmp.ne.s32.totalorder %s72, %s75
      %p84 = scmp.eq.s32.totalorder %s20, 1
      %p85 = por %p83, %p84
      %p86 = scmp.ne.s32.totalorder %s75, %s76
      %p87 = scmp.eq.s32.totalorder %s20, 0
      %p88 = por %p86, %p87
      %p89 = scmp.ne.s32.totalorder %s75, %s76
      %p90 = scmp.eq.s32.totalorder %s21, 1
      %p91 = por %p89, %p90
      %p93 = scmp.ne.s32.totalorder %s76, %s92
      %p94 = scmp.eq.s32.totalorder %s21, 0
      %p95 = por %p93, %p94
      %p96 = scmp.le.s32.totalorder 1, %s15
      %p97 = scmp.lt.s32.totalorder %s15, 3
      %p98 = pnand %p96, %p97
      %p99 = pneg %p98
      // Predicated region
      $region9: #{tpu_custom_call.1} parent=5 // pred_check
        _
      $region10: #{tpu_custom_call.1} parent=5 // pred_check_branch
        %101 = sbr.rel (%p98) target = $region12
      $region11: #{tpu_custom_call.1} parent=5 // pred_region
        %s102 = ssub.s32 %s15, 1
        // Predicated region
        $region13: #{tpu_custom_call.1} parent=11 // pred_check
          %p103 = pneg %p36
        $region14: #{tpu_custom_call.1} parent=11 // pred_check_branch
          %105 = sbr.rel (%p103) target = $region16
        $region15: #{tpu_custom_call.1} parent=11 // pred_region
          %s107 = ssub.s32 16, 16
          %108 = vsyncadd [#allocation6], %s107
          %111 = dma.hbm_to_smem %s0, 16, [#allocation3], [#allocation6]
        $region16: #{tpu_custom_call.1} parent=11 // pred_fallthru
          _
      $region12: #{tpu_custom_call.1} parent=5 // pred_fallthru
        _
      %p112 = scmp.lt.s32.totalorder %s15, 2
      // Predicated region
      $region17: #{tpu_custom_call.1} parent=5 // pred_check
        %p113 = pneg %p112
      $region18: #{tpu_custom_call.1} parent=5 // pred_check_branch
        %115 = sbr.rel (%p113) target = $region20
      $region19: #{tpu_custom_call.1} parent=5 // pred_region
        // Predicated region
        $region21: #{tpu_custom_call.1} parent=19 // pred_check
          %p116 = pneg %p56
        $region22: #{tpu_custom_call.1} parent=19 // pred_check_branch
          %118 = sbr.rel (%p116) target = $region24
        $region23: #{tpu_custom_call.1} parent=19 // pred_region
          %s119 = sand.u32 %s46, 1
          %s120 = scalar_lea.sflag [#allocation4], %s119
          %s121 = sand.u32 %s46, 1
          %s122 = smul.addr %s121, 64
          %s123 = scalar_lea.vmem [#allocation7], %s122
          %s125 = ssub.s32 1024, 1024
          %126 = vsyncadd %s120, %s125
          %s127 = smul.addr %s15, 8
          %s128 = smul.addr %s127, 128
          %s129 = scalar_lea.hbm %s1, %s128
          %s130 = sshll.u32 %s123, 4
          %s131 = int_to_ptr.vmem [resolvable:$true] %s130
          %136 = dma.hbm_to_vmem [thread:$0]  %s129, 1024, %s131, %s120, 128, 128, 8
        $region24: #{tpu_custom_call.1} parent=19 // pred_fallthru
          _
      $region20: #{tpu_custom_call.1} parent=5 // pred_fallthru
        _
      %p137 = scmp.le.s32.totalorder 1, %s15
      %p138 = scmp.lt.s32.totalorder %s15, 3
      %p139 = pnand %p137, %p138
      %p140 = pneg %p139
      // Predicated region
      $region25: #{tpu_custom_call.1} parent=5 // pred_check
        _
      $region26: #{tpu_custom_call.1} parent=5 // pred_check_branch
        %142 = sbr.rel (%p139) target = $region28
      $region27: #{tpu_custom_call.1} parent=5 // pred_region
        %s143 = ssub.s32 %s15, 1
        // Predicated region
        $region29: #{tpu_custom_call.1} parent=27 // pred_check
          %p144 = pneg %p36
        $region30: #{tpu_custom_call.1} parent=27 // pred_check_branch
          %146 = sbr.rel (%p144) target = $region32
        $region31: #{tpu_custom_call.1} parent=27 // pred_region
          %147 = dma.done [#allocation6], 16
        $region32: #{tpu_custom_call.1} parent=27 // pred_fallthru
          _
        %s148 = sand.u32 %s49, 1
        %s149 = scalar_lea.sflag [#allocation4], %s148
        %s150 = sand.u32 %s49, 1
        %s151 = smul.addr %s150, 64
        %s152 = scalar_lea.vmem [#allocation7], %s151
        // Predicated region
        $region33: #{tpu_custom_call.1} parent=27 // pred_check
          %p153 = pneg %p62
        $region34: #{tpu_custom_call.1} parent=27 // pred_check_branch
          %155 = sbr.rel (%p153) target = $region36
        $region35: #{tpu_custom_call.1} parent=27 // pred_region
          %156 = dma.done %s149, 1024
        $region36: #{tpu_custom_call.1} parent=27 // pred_fallthru
          _
        %157 = sfence
        %p158 = pneg %p36
        %p159 = pneg %p33
        %s160 = sand.u32 %s49, 1
        %s161 = scalar_lea.sflag [#allocation4], %s160
        %s162 = sand.u32 %s49, 1
        %s163 = smul.addr %s162, 64
        %s164 = scalar_lea.vmem [#allocation7], %s163
        %p165 = pneg %p62
        %p166 = pneg %p59
        %p167 = pneg %p88
        %p168 = pneg %p85
        %s169 = sand.u32 %s75, 1
        %s170 = scalar_lea.sflag [#allocation5], %s169
        %s171 = sand.u32 %s75, 1
        %s172 = smul.addr %s171, 64
        %s173 = scalar_lea.vmem [#allocation8], %s172
        %v174 = vld [vmem:[%s152] sm:$0xff]
        %v175 = vld [vmem:[%s152 + $0x8] sm:$0xff]
        %v176 = vld [vmem:[%s152 + $0x10] sm:$0xff]
        %v177 = vld [vmem:[%s152 + $0x18] sm:$0xff]
        %v178 = vld [vmem:[%s152 + $0x20] sm:$0xff]
        %v179 = vld [vmem:[%s152 + $0x28] sm:$0xff]
        %v180 = vld [vmem:[%s152 + $0x30] sm:$0xff]
        %v181 = vld [vmem:[%s152 + $0x38] sm:$0xff]
        %vm182 = vcmask 130048
        %v183 = vsel %vm182, %v174, -inf
        %v184 = vsel %vm182, %v176, -inf
        %v185 = vsel %vm182, %v178, -inf
        %v186 = vmax.f32 %v183, %v185
        %v187 = vsel %vm182, %v180, -inf
        %v188 = vmax.f32 %v184, %v187
        %v189 = vmax.f32 %v186, %v188
        %v190 = vsel %vm182, %v175, -inf
        %v191 = vsel %vm182, %v177, -inf
        %v192 = vsel %vm182, %v179, -inf
        %v193 = vmax.f32 %v190, %v192
        %v194 = vsel %vm182, %v181, -inf
        %v195 = vmax.f32 %v191, %v194
        %v196 = vmax.f32 %v193, %v195
        %v197 = vsel %vm182, %v174, 0.0
        %v198 = vsel %vm182, %v176, 0.0
        %v199 = vadd.f32 %v197, %v198
        %v200 = vsel %vm182, %v178, 0.0
        %v201 = vadd.f32 %v199, %v200
        %v202 = vsel %vm182, %v180, 0.0
        %v203 = vadd.f32 %v201, %v202
        %v204 = vsel %vm182, %v175, 0.0
        %v205 = vsel %vm182, %v177, 0.0
        %v206 = vadd.f32 %v204, %v205
        %v207 = vsel %vm182, %v179, 0.0
        %v208 = vadd.f32 %v206, %v207
        %v209 = vsel %vm182, %v181, 0.0
        %v210 = vadd.f32 %v208, %v209
        %v211 = vrcp.pop 4.0
        %v212 = vmul.f32 %v203, %v211
        %v213 = vmul.f32 %v210, %v211
        %vm214 = vcmask 179200
        %215 = vst.msk [vmem:[#allocation2] sm:$0xff] %vm214, 0.0
        %216 = vst.msk [vmem:[#allocation2 + $0x8] sm:$0xff] %vm214, 0.0
        %vm217 = vcmask 177152
        %218 = vst.msk [vmem:[#allocation2 + $0x10] sm:$0x3f] %vm217, 0.0
        %219 = vst.msk [vmem:[#allocation2 + $0x18] sm:$0xff] %vm214, 0.0
        %220 = vst.msk [vmem:[#allocation2 + $0x20] sm:$0xff] %vm214, 0.0
        %221 = vst.msk [vmem:[#allocation2 + $0x28] sm:$0x3f] %vm217, 0.0
        %224 = vrot.lane.b32.xlu0 %v189, 3
        %v225 = vpop.permute.xlu0 %224
        %226 = vrot.lane.b32.xlu0 %v196, 3
        %v227 = vpop.permute.xlu0 %226
        %vm230 = vcmask 154648
        %231 = vst.msk [vmem:[#allocation2 + $0x3] sm:$0xff] %vm230, %v225
        %232 = vst.msk [vmem:[#allocation2 + $0xb] sm:$0xff] %vm230, %v227
        %235 = vrot.lane.b32.xlu0 %v212, 3
        %v236 = vpop.permute.xlu0 %235
        %237 = vrot.lane.b32.xlu0 %v213, 3
        %v238 = vpop.permute.xlu0 %237
        %s241 = scalar_lea.vmem [#allocation2], 24
        %242 = vst.msk [vmem:[%s241 + $0x3] sm:$0xff] %vm230, %v236
        %243 = vst.msk [vmem:[%s241 + $0xb] sm:$0xff] %vm230, %v238
        %v244 = vld [vmem:[#allocation2] sm:$0xff]
        %v245 = vld [vmem:[#allocation2 + $0x8] sm:$0xff]
        %v246 = vld [vmem:[#allocation2 + $0x10] sm:$0x3f]
        %s247 = sld [smem:[#allocation3]]
        %v248 = vstv %s247
        %v249 = vmul.f32 %v248, %v244
        %v250 = vmul.f32 %v248, %v245
        %v251 = vadd.f32 %v249, 0.0
        %v252 = vadd.f32 %v250, 0.0
        %s253 = sld [smem:[#allocation3 + $0x7]]
        %v254 = vstv %s253
        %v255 = vmul.f32 %v254, %v244
        %v256 = vmul.f32 %v254, %v245
        %v257 = vmul.f32 %v254, %v246
        %vm261 = vcmask 1046528
        %v262 = vrot.slane %v255, 1
        %v263 = vrot.slane %v256, 1
        %v264 = vsel %vm261, %v262, %v263
        %v265 = vrot.slane %v257, 1
        %v266 = vsel %vm261, %v263, %v265
        %v269 = vadd.f32 %v251, %v264
        %v270 = vadd.f32 %v252, %v266
        %s271 = sld [smem:[#allocation3 + $0xe]]
        %v272 = vstv %s271
        %v273 = vmul.f32 %v272, %v244
        %v274 = vmul.f32 %v272, %v245
        %v275 = vmul.f32 %v272, %v246
        %vm279 = vcmask 1045504
        %v280 = vrot.slane %v273, 2
        %v281 = vrot.slane %v274, 2
        %v282 = vsel %vm279, %v280, %v281
        %v283 = vrot.slane %v275, 2
        %v284 = vsel %vm279, %v281, %v283
        %v287 = vadd.f32 %v269, %v282
        %v288 = vadd.f32 %v270, %v284
        %s289 = sld [smem:[#allocation3 + $0x15]]
        %v290 = vstv %s289
        %v291 = vmul.f32 %v290, %v244
        %v292 = vmul.f32 %v290, %v245
        %v293 = vmul.f32 %v290, %v246
        %vm297 = vcmask 1044480
        %v298 = vrot.slane %v291, 3
        %v299 = vrot.slane %v292, 3
        %v300 = vsel %vm297, %v298, %v299
        %v301 = vrot.slane %v293, 3
        %v302 = vsel %vm297, %v299, %v301
        %v305 = vadd.f32 %v287, %v300
        %v306 = vadd.f32 %v288, %v302
        %s307 = sld [smem:[#allocation3 + $0x1c]]
        %v308 = vstv %s307
        %v309 = vmul.f32 %v308, %v244
        %v310 = vmul.f32 %v308, %v245
        %v311 = vmul.f32 %v308, %v246
        %vm315 = vcmask 1043456
        %v316 = vrot.slane %v309, 4
        %v317 = vrot.slane %v310, 4
        %v318 = vsel %vm315, %v316, %v317
        %v319 = vrot.slane %v311, 4
        %v320 = vsel %vm315, %v317, %v319
        %v323 = vadd.f32 %v305, %v318
        %v324 = vadd.f32 %v306, %v320
        %s325 = sld [smem:[#allocation3 + $0x23]]
        %v326 = vstv %s325
        %v327 = vmul.f32 %v326, %v244
        %v328 = vmul.f32 %v326, %v245
        %v329 = vmul.f32 %v326, %v246
        %vm333 = vcmask 1042432
        %v334 = vrot.slane %v327, 5
        %v335 = vrot.slane %v328, 5
        %v336 = vsel %vm333, %v334, %v335
        %v337 = vrot.slane %v329, 5
        %v338 = vsel %vm333, %v335, %v337
        %v341 = vadd.f32 %v323, %v336
        %v342 = vadd.f32 %v324, %v338
        %s343 = sld [smem:[#allocation3 + $0x2a]]
        %v344 = vstv %s343
        %v345 = vmul.f32 %v344, %v244
        %v346 = vmul.f32 %v344, %v245
        %v347 = vmul.f32 %v344, %v246
        %vm351 = vcmask 1041408
        %v352 = vrot.slane %v345, 6
        %v353 = vrot.slane %v346, 6
        %v354 = vsel %vm351, %v352, %v353
        %v355 = vrot.slane %v347, 6
        %v356 = vsel %vm351, %v353, %v355
        %v359 = vadd.f32 %v341, %v354
        %v360 = vadd.f32 %v342, %v356
        %v361 = vld [vmem:[%s241] sm:$0xff]
        %v362 = vld [vmem:[%s241 + $0x8] sm:$0xff]
        %v363 = vld [vmem:[%s241 + $0x10] sm:$0x3f]
        %s364 = sld [smem:[#allocation3 + $0x31]]
        %v365 = vstv %s364
        %v366 = vmul.f32 %v365, %v361
        %v367 = vmul.f32 %v365, %v362
        %v368 = vadd.f32 %v359, %v366
        %v369 = vadd.f32 %v360, %v367
        %s370 = sld [smem:[#allocation3 + $0x38]]
        %v371 = vstv %s370
        %v372 = vmul.f32 %v371, %v361
        %v373 = vmul.f32 %v371, %v362
        %v374 = vmul.f32 %v371, %v363
        %v378 = vrot.slane %v372, 1
        %v379 = vrot.slane %v373, 1
        %v380 = vsel %vm261, %v378, %v379
        %v381 = vrot.slane %v374, 1
        %v382 = vsel %vm261, %v379, %v381
        %v385 = vadd.f32 %v368, %v380
        %v386 = vadd.f32 %v369, %v382
        %s387 = sld [smem:[#allocation3 + $0x3f]]
        %v388 = vstv %s387
        %v389 = vmul.f32 %v388, %v361
        %v390 = vmul.f32 %v388, %v362
        %v391 = vmul.f32 %v388, %v363
        %v395 = vrot.slane %v389, 2
        %v396 = vrot.slane %v390, 2
        %v397 = vsel %vm279, %v395, %v396
        %v398 = vrot.slane %v391, 2
        %v399 = vsel %vm279, %v396, %v398
        %v402 = vadd.f32 %v385, %v397
        %v403 = vadd.f32 %v386, %v399
        %s404 = sld [smem:[#allocation3 + $0x46]]
        %v405 = vstv %s404
        %v406 = vmul.f32 %v405, %v361
        %v407 = vmul.f32 %v405, %v362
        %v408 = vmul.f32 %v405, %v363
        %v412 = vrot.slane %v406, 3
        %v413 = vrot.slane %v407, 3
        %v414 = vsel %vm297, %v412, %v413
        %v415 = vrot.slane %v408, 3
        %v416 = vsel %vm297, %v413, %v415
        %v419 = vadd.f32 %v402, %v414
        %v420 = vadd.f32 %v403, %v416
        %s421 = sld [smem:[#allocation3 + $0x4d]]
        %v422 = vstv %s421
        %v423 = vmul.f32 %v422, %v361
        %v424 = vmul.f32 %v422, %v362
        %v425 = vmul.f32 %v422, %v363
        %v429 = vrot.slane %v423, 4
        %v430 = vrot.slane %v424, 4
        %v431 = vsel %vm315, %v429, %v430
        %v432 = vrot.slane %v425, 4
        %v433 = vsel %vm315, %v430, %v432
        %v436 = vadd.f32 %v419, %v431
        %v437 = vadd.f32 %v420, %v433
        %s438 = sld [smem:[#allocation3 + $0x54]]
        %v439 = vstv %s438
        %v440 = vmul.f32 %v439, %v361
        %v441 = vmul.f32 %v439, %v362
        %v442 = vmul.f32 %v439, %v363
        %v446 = vrot.slane %v440, 5
        %v447 = vrot.slane %v441, 5
        %v448 = vsel %vm333, %v446, %v447
        %v449 = vrot.slane %v442, 5
        %v450 = vsel %vm333, %v447, %v449
        %v453 = vadd.f32 %v436, %v448
        %v454 = vadd.f32 %v437, %v450
        %s455 = sld [smem:[#allocation3 + $0x5b]]
        %v456 = vstv %s455
        %v457 = vmul.f32 %v456, %v361
        %v458 = vmul.f32 %v456, %v362
        %v459 = vmul.f32 %v456, %v363
        %v463 = vrot.slane %v457, 6
        %v464 = vrot.slane %v458, 6
        %v465 = vsel %vm351, %v463, %v464
        %v466 = vrot.slane %v459, 6
        %v467 = vsel %vm351, %v464, %v466
        %v470 = vadd.f32 %v453, %v465
        %v471 = vadd.f32 %v454, %v467
        %s472 = sld [smem:[#allocation3 + $0x1]]
        %v473 = vstv %s472
        %v474 = vmul.f32 %v473, %v244
        %v475 = vmul.f32 %v473, %v245
        %478 = vrot.lane.b32.xlu0 %v474, 127
        %v479 = vpop.permute.xlu0 %478
        %480 = vrot.lane.b32.xlu0 %v475, 127
        %v481 = vpop.permute.xlu0 %480
        %v484 = vadd.f32 %v470, %v479
        %v485 = vadd.f32 %v471, %v481
        %s486 = sld [smem:[#allocation3 + $0x8]]
        %v487 = vstv %s486
        %v488 = vmul.f32 %v487, %v244
        %v489 = vmul.f32 %v487, %v245
        %v490 = vmul.f32 %v487, %v246
        %v494 = vrot.slane %v488, 1
        %v495 = vrot.slane %v489, 1
        %v496 = vsel %vm261, %v494, %v495
        %v497 = vrot.slane %v490, 1
        %v498 = vsel %vm261, %v495, %v497
        %499 = vrot.lane.b32.xlu0 %v496, 127
        %v500 = vpop.permute.xlu0 %499
        %501 = vrot.lane.b32.xlu0 %v498, 127
        %v502 = vpop.permute.xlu0 %501
        %v505 = vadd.f32 %v484, %v500
        %v506 = vadd.f32 %v485, %v502
        %s507 = sld [smem:[#allocation3 + $0xf]]
        %v508 = vstv %s507
        %v509 = vmul.f32 %v508, %v244
        %v510 = vmul.f32 %v508, %v245
        %v511 = vmul.f32 %v508, %v246
        %v515 = vrot.slane %v509, 2
        %v516 = vrot.slane %v510, 2
        %v517 = vsel %vm279, %v515, %v516
        %v518 = vrot.slane %v511, 2
        %v519 = vsel %vm279, %v516, %v518
        %520 = vrot.lane.b32.xlu0 %v517, 127
        %v521 = vpop.permute.xlu0 %520
        %522 = vrot.lane.b32.xlu0 %v519, 127
        %v523 = vpop.permute.xlu0 %522
        %v526 = vadd.f32 %v505, %v521
        %v527 = vadd.f32 %v506, %v523
        %s528 = sld [smem:[#allocation3 + $0x16]]
        %v529 = vstv %s528
        %v530 = vmul.f32 %v529, %v244
        %v531 = vmul.f32 %v529, %v245
        %v532 = vmul.f32 %v529, %v246
        %v536 = vrot.slane %v530, 3
        %v537 = vrot.slane %v531, 3
        %v538 = vsel %vm297, %v536, %v537
        %v539 = vrot.slane %v532, 3
        %v540 = vsel %vm297, %v537, %v539
        %541 = vrot.lane.b32.xlu0 %v538, 127
        %v542 = vpop.permute.xlu0 %541
        %543 = vrot.lane.b32.xlu0 %v540, 127
        %v544 = vpop.permute.xlu0 %543
        %v547 = vadd.f32 %v526, %v542
        %v548 = vadd.f32 %v527, %v544
        %s549 = sld [smem:[#allocation3 + $0x1d]]
        %v550 = vstv %s549
        %v551 = vmul.f32 %v550, %v244
        %v552 = vmul.f32 %v550, %v245
        %v553 = vmul.f32 %v550, %v246
        %v557 = vrot.slane %v551, 4
        %v558 = vrot.slane %v552, 4
        %v559 = vsel %vm315, %v557, %v558
        %v560 = vrot.slane %v553, 4
        %v561 = vsel %vm315, %v558, %v560
        %562 = vrot.lane.b32.xlu0 %v559, 127
        %v563 = vpop.permute.xlu0 %562
        %564 = vrot.lane.b32.xlu0 %v561, 127
        %v565 = vpop.permute.xlu0 %564
        %v568 = vadd.f32 %v547, %v563
        %v569 = vadd.f32 %v548, %v565
        %s570 = sld [smem:[#allocation3 + $0x24]]
        %v571 = vstv %s570
        %v572 = vmul.f32 %v571, %v244
        %v573 = vmul.f32 %v571, %v245
        %v574 = vmul.f32 %v571, %v246
        %v578 = vrot.slane %v572, 5
        %v579 = vrot.slane %v573, 5
        %v580 = vsel %vm333, %v578, %v579
        %v581 = vrot.slane %v574, 5
        %v582 = vsel %vm333, %v579, %v581
        %583 = vrot.lane.b32.xlu0 %v580, 127
        %v584 = vpop.permute.xlu0 %583
        %585 = vrot.lane.b32.xlu0 %v582, 127
        %v586 = vpop.permute.xlu0 %585
        %v589 = vadd.f32 %v568, %v584
        %v590 = vadd.f32 %v569, %v586
        %s591 = sld [smem:[#allocation3 + $0x2b]]
        %v592 = vstv %s591
        %v593 = vmul.f32 %v592, %v244
        %v594 = vmul.f32 %v592, %v245
        %v595 = vmul.f32 %v592, %v246
        %v599 = vrot.slane %v593, 6
        %v600 = vrot.slane %v594, 6
        %v601 = vsel %vm351, %v599, %v600
        %v602 = vrot.slane %v595, 6
        %v603 = vsel %vm351, %v600, %v602
        %604 = vrot.lane.b32.xlu0 %v601, 127
        %v605 = vpop.permute.xlu0 %604
        %606 = vrot.lane.b32.xlu0 %v603, 127
        %v607 = vpop.permute.xlu0 %606
        %v610 = vadd.f32 %v589, %v605
        %v611 = vadd.f32 %v590, %v607
        %s612 = sld [smem:[#allocation3 + $0x32]]
        %v613 = vstv %s612
        %v614 = vmul.f32 %v613, %v361
        %v615 = vmul.f32 %v613, %v362
        %618 = vrot.lane.b32.xlu0 %v614, 127
        %v619 = vpop.permute.xlu0 %618
        %620 = vrot.lane.b32.xlu0 %v615, 127
        %v621 = vpop.permute.xlu0 %620
        %v624 = vadd.f32 %v610, %v619
        %v625 = vadd.f32 %v611, %v621
        %s626 = sld [smem:[#allocation3 + $0x39]]
        %v627 = vstv %s626
        %v628 = vmul.f32 %v627, %v361
        %v629 = vmul.f32 %v627, %v362
        %v630 = vmul.f32 %v627, %v363
        %v634 = vrot.slane %v628, 1
        %v635 = vrot.slane %v629, 1
        %v636 = vsel %vm261, %v634, %v635
        %v637 = vrot.slane %v630, 1
        %v638 = vsel %vm261, %v635, %v637
        %639 = vrot.lane.b32.xlu0 %v636, 127
        %v640 = vpop.permute.xlu0 %639
        %641 = vrot.lane.b32.xlu0 %v638, 127
        %v642 = vpop.permute.xlu0 %641
        %v645 = vadd.f32 %v624, %v640
        %v646 = vadd.f32 %v625, %v642
        %s647 = sld [smem:[#allocation3 + $0x40]]
        %v648 = vstv %s647
        %v649 = vmul.f32 %v648, %v361
        %v650 = vmul.f32 %v648, %v362
        %v651 = vmul.f32 %v648, %v363
        %v655 = vrot.slane %v649, 2
        %v656 = vrot.slane %v650, 2
        %v657 = vsel %vm279, %v655, %v656
        %v658 = vrot.slane %v651, 2
        %v659 = vsel %vm279, %v656, %v658
        %660 = vrot.lane.b32.xlu0 %v657, 127
        %v661 = vpop.permute.xlu0 %660
        %662 = vrot.lane.b32.xlu0 %v659, 127
        %v663 = vpop.permute.xlu0 %662
        %v666 = vadd.f32 %v645, %v661
        %v667 = vadd.f32 %v646, %v663
        %s668 = sld [smem:[#allocation3 + $0x47]]
        %v669 = vstv %s668
        %v670 = vmul.f32 %v669, %v361
        %v671 = vmul.f32 %v669, %v362
        %v672 = vmul.f32 %v669, %v363
        %v676 = vrot.slane %v670, 3
        %v677 = vrot.slane %v671, 3
        %v678 = vsel %vm297, %v676, %v677
        %v679 = vrot.slane %v672, 3
        %v680 = vsel %vm297, %v677, %v679
        %681 = vrot.lane.b32.xlu0 %v678, 127
        %v682 = vpop.permute.xlu0 %681
        %683 = vrot.lane.b32.xlu0 %v680, 127
        %v684 = vpop.permute.xlu0 %683
        %v687 = vadd.f32 %v666, %v682
        %v688 = vadd.f32 %v667, %v684
        %s689 = sld [smem:[#allocation3 + $0x4e]]
        %v690 = vstv %s689
        %v691 = vmul.f32 %v690, %v361
        %v692 = vmul.f32 %v690, %v362
        %v693 = vmul.f32 %v690, %v363
        %v697 = vrot.slane %v691, 4
        %v698 = vrot.slane %v692, 4
        %v699 = vsel %vm315, %v697, %v698
        %v700 = vrot.slane %v693, 4
        %v701 = vsel %vm315, %v698, %v700
        %702 = vrot.lane.b32.xlu0 %v699, 127
        %v703 = vpop.permute.xlu0 %702
        %704 = vrot.lane.b32.xlu0 %v701, 127
        %v705 = vpop.permute.xlu0 %704
        %v708 = vadd.f32 %v687, %v703
        %v709 = vadd.f32 %v688, %v705
        %s710 = sld [smem:[#allocation3 + $0x55]]
        %v711 = vstv %s710
        %v712 = vmul.f32 %v711, %v361
        %v713 = vmul.f32 %v711, %v362
        %v714 = vmul.f32 %v711, %v363
        %v718 = vrot.slane %v712, 5
        %v719 = vrot.slane %v713, 5
        %v720 = vsel %vm333, %v718, %v719
        %v721 = vrot.slane %v714, 5
        %v722 = vsel %vm333, %v719, %v721
        %723 = vrot.lane.b32.xlu0 %v720, 127
        %v724 = vpop.permute.xlu0 %723
        %725 = vrot.lane.b32.xlu0 %v722, 127
        %v726 = vpop.permute.xlu0 %725
        %v729 = vadd.f32 %v708, %v724
        %v730 = vadd.f32 %v709, %v726
        %s731 = sld [smem:[#allocation3 + $0x5c]]
        %v732 = vstv %s731
        %v733 = vmul.f32 %v732, %v361
        %v734 = vmul.f32 %v732, %v362
        %v735 = vmul.f32 %v732, %v363
        %v739 = vrot.slane %v733, 6
        %v740 = vrot.slane %v734, 6
        %v741 = vsel %vm351, %v739, %v740
        %v742 = vrot.slane %v735, 6
        %v743 = vsel %vm351, %v740, %v742
        %744 = vrot.lane.b32.xlu0 %v741, 127
        %v745 = vpop.permute.xlu0 %744
        %746 = vrot.lane.b32.xlu0 %v743, 127
        %v747 = vpop.permute.xlu0 %746
        %v750 = vadd.f32 %v729, %v745
        %v751 = vadd.f32 %v730, %v747
        %s752 = sld [smem:[#allocation3 + $0x2]]
        %v753 = vstv %s752
        %v754 = vmul.f32 %v753, %v244
        %v755 = vmul.f32 %v753, %v245
        %758 = vrot.lane.b32.xlu0 %v754, 126
        %v759 = vpop.permute.xlu0 %758
        %760 = vrot.lane.b32.xlu0 %v755, 126
        %v761 = vpop.permute.xlu0 %760
        %v764 = vadd.f32 %v750, %v759
        %v765 = vadd.f32 %v751, %v761
        %s766 = sld [smem:[#allocation3 + $0x9]]
        %v767 = vstv %s766
        %v768 = vmul.f32 %v767, %v244
        %v769 = vmul.f32 %v767, %v245
        %v770 = vmul.f32 %v767, %v246
        %v774 = vrot.slane %v768, 1
        %v775 = vrot.slane %v769, 1
        %v776 = vsel %vm261, %v774, %v775
        %v777 = vrot.slane %v770, 1
        %v778 = vsel %vm261, %v775, %v777
        %779 = vrot.lane.b32.xlu0 %v776, 126
        %v780 = vpop.permute.xlu0 %779
        %781 = vrot.lane.b32.xlu0 %v778, 126
        %v782 = vpop.permute.xlu0 %781
        %v785 = vadd.f32 %v764, %v780
        %v786 = vadd.f32 %v765, %v782
        %s787 = sld [smem:[#allocation3 + $0x10]]
        %v788 = vstv %s787
        %v789 = vmul.f32 %v788, %v244
        %v790 = vmul.f32 %v788, %v245
        %v791 = vmul.f32 %v788, %v246
        %v795 = vrot.slane %v789, 2
        %v796 = vrot.slane %v790, 2
        %v797 = vsel %vm279, %v795, %v796
        %v798 = vrot.slane %v791, 2
        %v799 = vsel %vm279, %v796, %v798
        %800 = vrot.lane.b32.xlu0 %v797, 126
        %v801 = vpop.permute.xlu0 %800
        %802 = vrot.lane.b32.xlu0 %v799, 126
        %v803 = vpop.permute.xlu0 %802
        %v806 = vadd.f32 %v785, %v801
        %v807 = vadd.f32 %v786, %v803
        %s808 = sld [smem:[#allocation3 + $0x17]]
        %v809 = vstv %s808
        %v810 = vmul.f32 %v809, %v244
        %v811 = vmul.f32 %v809, %v245
        %v812 = vmul.f32 %v809, %v246
        %v816 = vrot.slane %v810, 3
        %v817 = vrot.slane %v811, 3
        %v818 = vsel %vm297, %v816, %v817
        %v819 = vrot.slane %v812, 3
        %v820 = vsel %vm297, %v817, %v819
        %821 = vrot.lane.b32.xlu0 %v818, 126
        %v822 = vpop.permute.xlu0 %821
        %823 = vrot.lane.b32.xlu0 %v820, 126
        %v824 = vpop.permute.xlu0 %823
        %v827 = vadd.f32 %v806, %v822
        %v828 = vadd.f32 %v807, %v824
        %s829 = sld [smem:[#allocation3 + $0x1e]]
        %v830 = vstv %s829
        %v831 = vmul.f32 %v830, %v244
        %v832 = vmul.f32 %v830, %v245
        %v833 = vmul.f32 %v830, %v246
        %v837 = vrot.slane %v831, 4
        %v838 = vrot.slane %v832, 4
        %v839 = vsel %vm315, %v837, %v838
        %v840 = vrot.slane %v833, 4
        %v841 = vsel %vm315, %v838, %v840
        %842 = vrot.lane.b32.xlu0 %v839, 126
        %v843 = vpop.permute.xlu0 %842
        %844 = vrot.lane.b32.xlu0 %v841, 126
        %v845 = vpop.permute.xlu0 %844
        %v848 = vadd.f32 %v827, %v843
        %v849 = vadd.f32 %v828, %v845
        %s850 = sld [smem:[#allocation3 + $0x25]]
        %v851 = vstv %s850
        %v852 = vmul.f32 %v851, %v244
        %v853 = vmul.f32 %v851, %v245
        %v854 = vmul.f32 %v851, %v246
        %v858 = vrot.slane %v852, 5
        %v859 = vrot.slane %v853, 5
        %v860 = vsel %vm333, %v858, %v859
        %v861 = vrot.slane %v854, 5
        %v862 = vsel %vm333, %v859, %v861
        %863 = vrot.lane.b32.xlu0 %v860, 126
        %v864 = vpop.permute.xlu0 %863
        %865 = vrot.lane.b32.xlu0 %v862, 126
        %v866 = vpop.permute.xlu0 %865
        %v869 = vadd.f32 %v848, %v864
        %v870 = vadd.f32 %v849, %v866
        %s871 = sld [smem:[#allocation3 + $0x2c]]
        %v872 = vstv %s871
        %v873 = vmul.f32 %v872, %v244
        %v874 = vmul.f32 %v872, %v245
        %v875 = vmul.f32 %v872, %v246
        %v879 = vrot.slane %v873, 6
        %v880 = vrot.slane %v874, 6
        %v881 = vsel %vm351, %v879, %v880
        %v882 = vrot.slane %v875, 6
        %v883 = vsel %vm351, %v880, %v882
        %884 = vrot.lane.b32.xlu0 %v881, 126
        %v885 = vpop.permute.xlu0 %884
        %886 = vrot.lane.b32.xlu0 %v883, 126
        %v887 = vpop.permute.xlu0 %886
        %v890 = vadd.f32 %v869, %v885
        %v891 = vadd.f32 %v870, %v887
        %s892 = sld [smem:[#allocation3 + $0x33]]
        %v893 = vstv %s892
        %v894 = vmul.f32 %v893, %v361
        %v895 = vmul.f32 %v893, %v362
        %898 = vrot.lane.b32.xlu0 %v894, 126
        %v899 = vpop.permute.xlu0 %898
        %900 = vrot.lane.b32.xlu0 %v895, 126
        %v901 = vpop.permute.xlu0 %900
        %v904 = vadd.f32 %v890, %v899
        %v905 = vadd.f32 %v891, %v901
        %s906 = sld [smem:[#allocation3 + $0x3a]]
        %v907 = vstv %s906
        %v908 = vmul.f32 %v907, %v361
        %v909 = vmul.f32 %v907, %v362
        %v910 = vmul.f32 %v907, %v363
        %v914 = vrot.slane %v908, 1
        %v915 = vrot.slane %v909, 1
        %v916 = vsel %vm261, %v914, %v915
        %v917 = vrot.slane %v910, 1
        %v918 = vsel %vm261, %v915, %v917
        %919 = vrot.lane.b32.xlu0 %v916, 126
        %v920 = vpop.permute.xlu0 %919
        %921 = vrot.lane.b32.xlu0 %v918, 126
        %v922 = vpop.permute.xlu0 %921
        %v925 = vadd.f32 %v904, %v920
        %v926 = vadd.f32 %v905, %v922
        %s927 = sld [smem:[#allocation3 + $0x41]]
        %v928 = vstv %s927
        %v929 = vmul.f32 %v928, %v361
        %v930 = vmul.f32 %v928, %v362
        %v931 = vmul.f32 %v928, %v363
        %v935 = vrot.slane %v929, 2
        %v936 = vrot.slane %v930, 2
        %v937 = vsel %vm279, %v935, %v936
        %v938 = vrot.slane %v931, 2
        %v939 = vsel %vm279, %v936, %v938
        %940 = vrot.lane.b32.xlu0 %v937, 126
        %v941 = vpop.permute.xlu0 %940
        %942 = vrot.lane.b32.xlu0 %v939, 126
        %v943 = vpop.permute.xlu0 %942
        %v946 = vadd.f32 %v925, %v941
        %v947 = vadd.f32 %v926, %v943
        %s948 = sld [smem:[#allocation3 + $0x48]]
        %v949 = vstv %s948
        %v950 = vmul.f32 %v949, %v361
        %v951 = vmul.f32 %v949, %v362
        %v952 = vmul.f32 %v949, %v363
        %v956 = vrot.slane %v950, 3
        %v957 = vrot.slane %v951, 3
        %v958 = vsel %vm297, %v956, %v957
        %v959 = vrot.slane %v952, 3
        %v960 = vsel %vm297, %v957, %v959
        %961 = vrot.lane.b32.xlu0 %v958, 126
        %v962 = vpop.permute.xlu0 %961
        %963 = vrot.lane.b32.xlu0 %v960, 126
        %v964 = vpop.permute.xlu0 %963
        %v967 = vadd.f32 %v946, %v962
        %v968 = vadd.f32 %v947, %v964
        %s969 = sld [smem:[#allocation3 + $0x4f]]
        %v970 = vstv %s969
        %v971 = vmul.f32 %v970, %v361
        %v972 = vmul.f32 %v970, %v362
        %v973 = vmul.f32 %v970, %v363
        %v977 = vrot.slane %v971, 4
        %v978 = vrot.slane %v972, 4
        %v979 = vsel %vm315, %v977, %v978
        %v980 = vrot.slane %v973, 4
        %v981 = vsel %vm315, %v978, %v980
        %982 = vrot.lane.b32.xlu0 %v979, 126
        %v983 = vpop.permute.xlu0 %982
        %984 = vrot.lane.b32.xlu0 %v981, 126
        %v985 = vpop.permute.xlu0 %984
        %v988 = vadd.f32 %v967, %v983
        %v989 = vadd.f32 %v968, %v985
        %s990 = sld [smem:[#allocation3 + $0x56]]
        %v991 = vstv %s990
        %v992 = vmul.f32 %v991, %v361
        %v993 = vmul.f32 %v991, %v362
        %v994 = vmul.f32 %v991, %v363
        %v998 = vrot.slane %v992, 5
        %v999 = vrot.slane %v993, 5
        %v1000 = vsel %vm333, %v998, %v999
        %v1001 = vrot.slane %v994, 5
        %v1002 = vsel %vm333, %v999, %v1001
        %1003 = vrot.lane.b32.xlu0 %v1000, 126
        %v1004 = vpop.permute.xlu0 %1003
        %1005 = vrot.lane.b32.xlu0 %v1002, 126
        %v1006 = vpop.permute.xlu0 %1005
        %v1009 = vadd.f32 %v988, %v1004
        %v1010 = vadd.f32 %v989, %v1006
        %s1011 = sld [smem:[#allocation3 + $0x5d]]
        %v1012 = vstv %s1011
        %v1013 = vmul.f32 %v1012, %v361
        %v1014 = vmul.f32 %v1012, %v362
        %v1015 = vmul.f32 %v1012, %v363
        %v1019 = vrot.slane %v1013, 6
        %v1020 = vrot.slane %v1014, 6
        %v1021 = vsel %vm351, %v1019, %v1020
        %v1022 = vrot.slane %v1015, 6
        %v1023 = vsel %vm351, %v1020, %v1022
        %1024 = vrot.lane.b32.xlu0 %v1021, 126
        %v1025 = vpop.permute.xlu0 %1024
        %1026 = vrot.lane.b32.xlu0 %v1023, 126
        %v1027 = vpop.permute.xlu0 %1026
        %v1030 = vadd.f32 %v1009, %v1025
        %v1031 = vadd.f32 %v1010, %v1027
        %s1032 = sld [smem:[#allocation3 + $0x3]]
        %v1033 = vstv %s1032
        %v1034 = vmul.f32 %v1033, %v244
        %v1035 = vmul.f32 %v1033, %v245
        %1038 = vrot.lane.b32.xlu0 %v1034, 125
        %v1039 = vpop.permute.xlu0 %1038
        %1040 = vrot.lane.b32.xlu0 %v1035, 125
        %v1041 = vpop.permute.xlu0 %1040
        %v1044 = vadd.f32 %v1030, %v1039
        %v1045 = vadd.f32 %v1031, %v1041
        %s1046 = sld [smem:[#allocation3 + $0xa]]
        %v1047 = vstv %s1046
        %v1048 = vmul.f32 %v1047, %v244
        %v1049 = vmul.f32 %v1047, %v245
        %v1050 = vmul.f32 %v1047, %v246
        %v1054 = vrot.slane %v1048, 1
        %v1055 = vrot.slane %v1049, 1
        %v1056 = vsel %vm261, %v1054, %v1055
        %v1057 = vrot.slane %v1050, 1
        %v1058 = vsel %vm261, %v1055, %v1057
        %1059 = vrot.lane.b32.xlu0 %v1056, 125
        %v1060 = vpop.permute.xlu0 %1059
        %1061 = vrot.lane.b32.xlu0 %v1058, 125
        %v1062 = vpop.permute.xlu0 %1061
        %v1065 = vadd.f32 %v1044, %v1060
        %v1066 = vadd.f32 %v1045, %v1062
        %s1067 = sld [smem:[#allocation3 + $0x11]]
        %v1068 = vstv %s1067
        %v1069 = vmul.f32 %v1068, %v244
        %v1070 = vmul.f32 %v1068, %v245
        %v1071 = vmul.f32 %v1068, %v246
        %v1075 = vrot.slane %v1069, 2
        %v1076 = vrot.slane %v1070, 2
        %v1077 = vsel %vm279, %v1075, %v1076
        %v1078 = vrot.slane %v1071, 2
        %v1079 = vsel %vm279, %v1076, %v1078
        %1080 = vrot.lane.b32.xlu0 %v1077, 125
        %v1081 = vpop.permute.xlu0 %1080
        %1082 = vrot.lane.b32.xlu0 %v1079, 125
        %v1083 = vpop.permute.xlu0 %1082
        %v1086 = vadd.f32 %v1065, %v1081
        %v1087 = vadd.f32 %v1066, %v1083
        %s1088 = sld [smem:[#allocation3 + $0x18]]
        %v1089 = vstv %s1088
        %v1090 = vmul.f32 %v1089, %v244
        %v1091 = vmul.f32 %v1089, %v245
        %v1092 = vmul.f32 %v1089, %v246
        %v1096 = vrot.slane %v1090, 3
        %v1097 = vrot.slane %v1091, 3
        %v1098 = vsel %vm297, %v1096, %v1097
        %v1099 = vrot.slane %v1092, 3
        %v1100 = vsel %vm297, %v1097, %v1099
        %1101 = vrot.lane.b32.xlu0 %v1098, 125
        %v1102 = vpop.permute.xlu0 %1101
        %1103 = vrot.lane.b32.xlu0 %v1100, 125
        %v1104 = vpop.permute.xlu0 %1103
        %v1107 = vadd.f32 %v1086, %v1102
        %v1108 = vadd.f32 %v1087, %v1104
        %s1109 = sld [smem:[#allocation3 + $0x1f]]
        %v1110 = vstv %s1109
        %v1111 = vmul.f32 %v1110, %v244
        %v1112 = vmul.f32 %v1110, %v245
        %v1113 = vmul.f32 %v1110, %v246
        %v1117 = vrot.slane %v1111, 4
        %v1118 = vrot.slane %v1112, 4
        %v1119 = vsel %vm315, %v1117, %v1118
        %v1120 = vrot.slane %v1113, 4
        %v1121 = vsel %vm315, %v1118, %v1120
        %1122 = vrot.lane.b32.xlu0 %v1119, 125
        %v1123 = vpop.permute.xlu0 %1122
        %1124 = vrot.lane.b32.xlu0 %v1121, 125
        %v1125 = vpop.permute.xlu0 %1124
        %v1128 = vadd.f32 %v1107, %v1123
        %v1129 = vadd.f32 %v1108, %v1125
        %s1130 = sld [smem:[#allocation3 + $0x26]]
        %v1131 = vstv %s1130
        %v1132 = vmul.f32 %v1131, %v244
        %v1133 = vmul.f32 %v1131, %v245
        %v1134 = vmul.f32 %v1131, %v246
        %v1138 = vrot.slane %v1132, 5
        %v1139 = vrot.slane %v1133, 5
        %v1140 = vsel %vm333, %v1138, %v1139
        %v1141 = vrot.slane %v1134, 5
        %v1142 = vsel %vm333, %v1139, %v1141
        %1143 = vrot.lane.b32.xlu0 %v1140, 125
        %v1144 = vpop.permute.xlu0 %1143
        %1145 = vrot.lane.b32.xlu0 %v1142, 125
        %v1146 = vpop.permute.xlu0 %1145
        %v1149 = vadd.f32 %v1128, %v1144
        %v1150 = vadd.f32 %v1129, %v1146
        %s1151 = sld [smem:[#allocation3 + $0x2d]]
        %v1152 = vstv %s1151
        %v1153 = vmul.f32 %v1152, %v244
        %v1154 = vmul.f32 %v1152, %v245
        %v1155 = vmul.f32 %v1152, %v246
        %v1159 = vrot.slane %v1153, 6
        %v1160 = vrot.slane %v1154, 6
        %v1161 = vsel %vm351, %v1159, %v1160
        %v1162 = vrot.slane %v1155, 6
        %v1163 = vsel %vm351, %v1160, %v1162
        %1164 = vrot.lane.b32.xlu0 %v1161, 125
        %v1165 = vpop.permute.xlu0 %1164
        %1166 = vrot.lane.b32.xlu0 %v1163, 125
        %v1167 = vpop.permute.xlu0 %1166
        %v1170 = vadd.f32 %v1149, %v1165
        %v1171 = vadd.f32 %v1150, %v1167
        %s1172 = sld [smem:[#allocation3 + $0x34]]
        %v1173 = vstv %s1172
        %v1174 = vmul.f32 %v1173, %v361
        %v1175 = vmul.f32 %v1173, %v362
        %1178 = vrot.lane.b32.xlu0 %v1174, 125
        %v1179 = vpop.permute.xlu0 %1178
        %1180 = vrot.lane.b32.xlu0 %v1175, 125
        %v1181 = vpop.permute.xlu0 %1180
        %v1184 = vadd.f32 %v1170, %v1179
        %v1185 = vadd.f32 %v1171, %v1181
        %s1186 = sld [smem:[#allocation3 + $0x3b]]
        %v1187 = vstv %s1186
        %v1188 = vmul.f32 %v1187, %v361
        %v1189 = vmul.f32 %v1187, %v362
        %v1190 = vmul.f32 %v1187, %v363
        %v1194 = vrot.slane %v1188, 1
        %v1195 = vrot.slane %v1189, 1
        %v1196 = vsel %vm261, %v1194, %v1195
        %v1197 = vrot.slane %v1190, 1
        %v1198 = vsel %vm261, %v1195, %v1197
        %1199 = vrot.lane.b32.xlu0 %v1196, 125
        %v1200 = vpop.permute.xlu0 %1199
        %1201 = vrot.lane.b32.xlu0 %v1198, 125
        %v1202 = vpop.permute.xlu0 %1201
        %v1205 = vadd.f32 %v1184, %v1200
        %v1206 = vadd.f32 %v1185, %v1202
        %s1207 = sld [smem:[#allocation3 + $0x42]]
        %v1208 = vstv %s1207
        %v1209 = vmul.f32 %v1208, %v361
        %v1210 = vmul.f32 %v1208, %v362
        %v1211 = vmul.f32 %v1208, %v363
        %v1215 = vrot.slane %v1209, 2
        %v1216 = vrot.slane %v1210, 2
        %v1217 = vsel %vm279, %v1215, %v1216
        %v1218 = vrot.slane %v1211, 2
        %v1219 = vsel %vm279, %v1216, %v1218
        %1220 = vrot.lane.b32.xlu0 %v1217, 125
        %v1221 = vpop.permute.xlu0 %1220
        %1222 = vrot.lane.b32.xlu0 %v1219, 125
        %v1223 = vpop.permute.xlu0 %1222
        %v1226 = vadd.f32 %v1205, %v1221
        %v1227 = vadd.f32 %v1206, %v1223
        %s1228 = sld [smem:[#allocation3 + $0x49]]
        %v1229 = vstv %s1228
        %v1230 = vmul.f32 %v1229, %v361
        %v1231 = vmul.f32 %v1229, %v362
        %v1232 = vmul.f32 %v1229, %v363
        %v1236 = vrot.slane %v1230, 3
        %v1237 = vrot.slane %v1231, 3
        %v1238 = vsel %vm297, %v1236, %v1237
        %v1239 = vrot.slane %v1232, 3
        %v1240 = vsel %vm297, %v1237, %v1239
        %1241 = vrot.lane.b32.xlu0 %v1238, 125
        %v1242 = vpop.permute.xlu0 %1241
        %1243 = vrot.lane.b32.xlu0 %v1240, 125
        %v1244 = vpop.permute.xlu0 %1243
        %v1247 = vadd.f32 %v1226, %v1242
        %v1248 = vadd.f32 %v1227, %v1244
        %s1249 = sld [smem:[#allocation3 + $0x50]]
        %v1250 = vstv %s1249
        %v1251 = vmul.f32 %v1250, %v361
        %v1252 = vmul.f32 %v1250, %v362
        %v1253 = vmul.f32 %v1250, %v363
        %v1257 = vrot.slane %v1251, 4
        %v1258 = vrot.slane %v1252, 4
        %v1259 = vsel %vm315, %v1257, %v1258
        %v1260 = vrot.slane %v1253, 4
        %v1261 = vsel %vm315, %v1258, %v1260
        %1262 = vrot.lane.b32.xlu0 %v1259, 125
        %v1263 = vpop.permute.xlu0 %1262
        %1264 = vrot.lane.b32.xlu0 %v1261, 125
        %v1265 = vpop.permute.xlu0 %1264
        %v1268 = vadd.f32 %v1247, %v1263
        %v1269 = vadd.f32 %v1248, %v1265
        %s1270 = sld [smem:[#allocation3 + $0x57]]
        %v1271 = vstv %s1270
        %v1272 = vmul.f32 %v1271, %v361
        %v1273 = vmul.f32 %v1271, %v362
        %v1274 = vmul.f32 %v1271, %v363
        %v1278 = vrot.slane %v1272, 5
        %v1279 = vrot.slane %v1273, 5
        %v1280 = vsel %vm333, %v1278, %v1279
        %v1281 = vrot.slane %v1274, 5
        %v1282 = vsel %vm333, %v1279, %v1281
        %1283 = vrot.lane.b32.xlu0 %v1280, 125
        %v1284 = vpop.permute.xlu0 %1283
        %1285 = vrot.lane.b32.xlu0 %v1282, 125
        %v1286 = vpop.permute.xlu0 %1285
        %v1289 = vadd.f32 %v1268, %v1284
        %v1290 = vadd.f32 %v1269, %v1286
        %s1291 = sld [smem:[#allocation3 + $0x5e]]
        %v1292 = vstv %s1291
        %v1293 = vmul.f32 %v1292, %v361
        %v1294 = vmul.f32 %v1292, %v362
        %v1295 = vmul.f32 %v1292, %v363
        %v1299 = vrot.slane %v1293, 6
        %v1300 = vrot.slane %v1294, 6
        %v1301 = vsel %vm351, %v1299, %v1300
        %v1302 = vrot.slane %v1295, 6
        %v1303 = vsel %vm351, %v1300, %v1302
        %1304 = vrot.lane.b32.xlu0 %v1301, 125
        %v1305 = vpop.permute.xlu0 %1304
        %1306 = vrot.lane.b32.xlu0 %v1303, 125
        %v1307 = vpop.permute.xlu0 %1306
        %v1310 = vadd.f32 %v1289, %v1305
        %v1311 = vadd.f32 %v1290, %v1307
        %s1312 = sld [smem:[#allocation3 + $0x4]]
        %v1313 = vstv %s1312
        %v1314 = vmul.f32 %v1313, %v244
        %v1315 = vmul.f32 %v1313, %v245
        %1318 = vrot.lane.b32.xlu0 %v1314, 124
        %v1319 = vpop.permute.xlu0 %1318
        %1320 = vrot.lane.b32.xlu0 %v1315, 124
        %v1321 = vpop.permute.xlu0 %1320
        %v1324 = vadd.f32 %v1310, %v1319
        %v1325 = vadd.f32 %v1311, %v1321
        %s1326 = sld [smem:[#allocation3 + $0xb]]
        %v1327 = vstv %s1326
        %v1328 = vmul.f32 %v1327, %v244
        %v1329 = vmul.f32 %v1327, %v245
        %v1330 = vmul.f32 %v1327, %v246
        %v1334 = vrot.slane %v1328, 1
        %v1335 = vrot.slane %v1329, 1
        %v1336 = vsel %vm261, %v1334, %v1335
        %v1337 = vrot.slane %v1330, 1
        %v1338 = vsel %vm261, %v1335, %v1337
        %1339 = vrot.lane.b32.xlu0 %v1336, 124
        %v1340 = vpop.permute.xlu0 %1339
        %1341 = vrot.lane.b32.xlu0 %v1338, 124
        %v1342 = vpop.permute.xlu0 %1341
        %v1345 = vadd.f32 %v1324, %v1340
        %v1346 = vadd.f32 %v1325, %v1342
        %s1347 = sld [smem:[#allocation3 + $0x12]]
        %v1348 = vstv %s1347
        %v1349 = vmul.f32 %v1348, %v244
        %v1350 = vmul.f32 %v1348, %v245
        %v1351 = vmul.f32 %v1348, %v246
        %v1355 = vrot.slane %v1349, 2
        %v1356 = vrot.slane %v1350, 2
        %v1357 = vsel %vm279, %v1355, %v1356
        %v1358 = vrot.slane %v1351, 2
        %v1359 = vsel %vm279, %v1356, %v1358
        %1360 = vrot.lane.b32.xlu0 %v1357, 124
        %v1361 = vpop.permute.xlu0 %1360
        %1362 = vrot.lane.b32.xlu0 %v1359, 124
        %v1363 = vpop.permute.xlu0 %1362
        %v1366 = vadd.f32 %v1345, %v1361
        %v1367 = vadd.f32 %v1346, %v1363
        %s1368 = sld [smem:[#allocation3 + $0x19]]
        %v1369 = vstv %s1368
        %v1370 = vmul.f32 %v1369, %v244
        %v1371 = vmul.f32 %v1369, %v245
        %v1372 = vmul.f32 %v1369, %v246
        %v1376 = vrot.slane %v1370, 3
        %v1377 = vrot.slane %v1371, 3
        %v1378 = vsel %vm297, %v1376, %v1377
        %v1379 = vrot.slane %v1372, 3
        %v1380 = vsel %vm297, %v1377, %v1379
        %1381 = vrot.lane.b32.xlu0 %v1378, 124
        %v1382 = vpop.permute.xlu0 %1381
        %1383 = vrot.lane.b32.xlu0 %v1380, 124
        %v1384 = vpop.permute.xlu0 %1383
        %v1387 = vadd.f32 %v1366, %v1382
        %v1388 = vadd.f32 %v1367, %v1384
        %s1389 = sld [smem:[#allocation3 + $0x20]]
        %v1390 = vstv %s1389
        %v1391 = vmul.f32 %v1390, %v244
        %v1392 = vmul.f32 %v1390, %v245
        %v1393 = vmul.f32 %v1390, %v246
        %v1397 = vrot.slane %v1391, 4
        %v1398 = vrot.slane %v1392, 4
        %v1399 = vsel %vm315, %v1397, %v1398
        %v1400 = vrot.slane %v1393, 4
        %v1401 = vsel %vm315, %v1398, %v1400
        %1402 = vrot.lane.b32.xlu0 %v1399, 124
        %v1403 = vpop.permute.xlu0 %1402
        %1404 = vrot.lane.b32.xlu0 %v1401, 124
        %v1405 = vpop.permute.xlu0 %1404
        %v1408 = vadd.f32 %v1387, %v1403
        %v1409 = vadd.f32 %v1388, %v1405
        %s1410 = sld [smem:[#allocation3 + $0x27]]
        %v1411 = vstv %s1410
        %v1412 = vmul.f32 %v1411, %v244
        %v1413 = vmul.f32 %v1411, %v245
        %v1414 = vmul.f32 %v1411, %v246
        %v1418 = vrot.slane %v1412, 5
        %v1419 = vrot.slane %v1413, 5
        %v1420 = vsel %vm333, %v1418, %v1419
        %v1421 = vrot.slane %v1414, 5
        %v1422 = vsel %vm333, %v1419, %v1421
        %1423 = vrot.lane.b32.xlu0 %v1420, 124
        %v1424 = vpop.permute.xlu0 %1423
        %1425 = vrot.lane.b32.xlu0 %v1422, 124
        %v1426 = vpop.permute.xlu0 %1425
        %v1429 = vadd.f32 %v1408, %v1424
        %v1430 = vadd.f32 %v1409, %v1426
        %s1431 = sld [smem:[#allocation3 + $0x2e]]
        %v1432 = vstv %s1431
        %v1433 = vmul.f32 %v1432, %v244
        %v1434 = vmul.f32 %v1432, %v245
        %v1435 = vmul.f32 %v1432, %v246
        %v1439 = vrot.slane %v1433, 6
        %v1440 = vrot.slane %v1434, 6
        %v1441 = vsel %vm351, %v1439, %v1440
        %v1442 = vrot.slane %v1435, 6
        %v1443 = vsel %vm351, %v1440, %v1442
        %1444 = vrot.lane.b32.xlu0 %v1441, 124
        %v1445 = vpop.permute.xlu0 %1444
        %1446 = vrot.lane.b32.xlu0 %v1443, 124
        %v1447 = vpop.permute.xlu0 %1446
        %v1450 = vadd.f32 %v1429, %v1445
        %v1451 = vadd.f32 %v1430, %v1447
        %s1452 = sld [smem:[#allocation3 + $0x35]]
        %v1453 = vstv %s1452
        %v1454 = vmul.f32 %v1453, %v361
        %v1455 = vmul.f32 %v1453, %v362
        %1458 = vrot.lane.b32.xlu0 %v1454, 124
        %v1459 = vpop.permute.xlu0 %1458
        %1460 = vrot.lane.b32.xlu0 %v1455, 124
        %v1461 = vpop.permute.xlu0 %1460
        %v1464 = vadd.f32 %v1450, %v1459
        %v1465 = vadd.f32 %v1451, %v1461
        %s1466 = sld [smem:[#allocation3 + $0x3c]]
        %v1467 = vstv %s1466
        %v1468 = vmul.f32 %v1467, %v361
        %v1469 = vmul.f32 %v1467, %v362
        %v1470 = vmul.f32 %v1467, %v363
        %v1474 = vrot.slane %v1468, 1
        %v1475 = vrot.slane %v1469, 1
        %v1476 = vsel %vm261, %v1474, %v1475
        %v1477 = vrot.slane %v1470, 1
        %v1478 = vsel %vm261, %v1475, %v1477
        %1479 = vrot.lane.b32.xlu0 %v1476, 124
        %v1480 = vpop.permute.xlu0 %1479
        %1481 = vrot.lane.b32.xlu0 %v1478, 124
        %v1482 = vpop.permute.xlu0 %1481
        %v1485 = vadd.f32 %v1464, %v1480
        %v1486 = vadd.f32 %v1465, %v1482
        %s1487 = sld [smem:[#allocation3 + $0x43]]
        %v1488 = vstv %s1487
        %v1489 = vmul.f32 %v1488, %v361
        %v1490 = vmul.f32 %v1488, %v362
        %v1491 = vmul.f32 %v1488, %v363
        %v1495 = vrot.slane %v1489, 2
        %v1496 = vrot.slane %v1490, 2
        %v1497 = vsel %vm279, %v1495, %v1496
        %v1498 = vrot.slane %v1491, 2
        %v1499 = vsel %vm279, %v1496, %v1498
        %1500 = vrot.lane.b32.xlu0 %v1497, 124
        %v1501 = vpop.permute.xlu0 %1500
        %1502 = vrot.lane.b32.xlu0 %v1499, 124
        %v1503 = vpop.permute.xlu0 %1502
        %v1506 = vadd.f32 %v1485, %v1501
        %v1507 = vadd.f32 %v1486, %v1503
        %s1508 = sld [smem:[#allocation3 + $0x4a]]
        %v1509 = vstv %s1508
        %v1510 = vmul.f32 %v1509, %v361
        %v1511 = vmul.f32 %v1509, %v362
        %v1512 = vmul.f32 %v1509, %v363
        %v1516 = vrot.slane %v1510, 3
        %v1517 = vrot.slane %v1511, 3
        %v1518 = vsel %vm297, %v1516, %v1517
        %v1519 = vrot.slane %v1512, 3
        %v1520 = vsel %vm297, %v1517, %v1519
        %1521 = vrot.lane.b32.xlu0 %v1518, 124
        %v1522 = vpop.permute.xlu0 %1521
        %1523 = vrot.lane.b32.xlu0 %v1520, 124
        %v1524 = vpop.permute.xlu0 %1523
        %v1527 = vadd.f32 %v1506, %v1522
        %v1528 = vadd.f32 %v1507, %v1524
        %s1529 = sld [smem:[#allocation3 + $0x51]]
        %v1530 = vstv %s1529
        %v1531 = vmul.f32 %v1530, %v361
        %v1532 = vmul.f32 %v1530, %v362
        %v1533 = vmul.f32 %v1530, %v363
        %v1537 = vrot.slane %v1531, 4
        %v1538 = vrot.slane %v1532, 4
        %v1539 = vsel %vm315, %v1537, %v1538
        %v1540 = vrot.slane %v1533, 4
        %v1541 = vsel %vm315, %v1538, %v1540
        %1542 = vrot.lane.b32.xlu0 %v1539, 124
        %v1543 = vpop.permute.xlu0 %1542
        %1544 = vrot.lane.b32.xlu0 %v1541, 124
        %v1545 = vpop.permute.xlu0 %1544
        %v1548 = vadd.f32 %v1527, %v1543
        %v1549 = vadd.f32 %v1528, %v1545
        %s1550 = sld [smem:[#allocation3 + $0x58]]
        %v1551 = vstv %s1550
        %v1552 = vmul.f32 %v1551, %v361
        %v1553 = vmul.f32 %v1551, %v362
        %v1554 = vmul.f32 %v1551, %v363
        %v1558 = vrot.slane %v1552, 5
        %v1559 = vrot.slane %v1553, 5
        %v1560 = vsel %vm333, %v1558, %v1559
        %v1561 = vrot.slane %v1554, 5
        %v1562 = vsel %vm333, %v1559, %v1561
        %1563 = vrot.lane.b32.xlu0 %v1560, 124
        %v1564 = vpop.permute.xlu0 %1563
        %1565 = vrot.lane.b32.xlu0 %v1562, 124
        %v1566 = vpop.permute.xlu0 %1565
        %v1569 = vadd.f32 %v1548, %v1564
        %v1570 = vadd.f32 %v1549, %v1566
        %s1571 = sld [smem:[#allocation3 + $0x5f]]
        %v1572 = vstv %s1571
        %v1573 = vmul.f32 %v1572, %v361
        %v1574 = vmul.f32 %v1572, %v362
        %v1575 = vmul.f32 %v1572, %v363
        %v1579 = vrot.slane %v1573, 6
        %v1580 = vrot.slane %v1574, 6
        %v1581 = vsel %vm351, %v1579, %v1580
        %v1582 = vrot.slane %v1575, 6
        %v1583 = vsel %vm351, %v1580, %v1582
        %1584 = vrot.lane.b32.xlu0 %v1581, 124
        %v1585 = vpop.permute.xlu0 %1584
        %1586 = vrot.lane.b32.xlu0 %v1583, 124
        %v1587 = vpop.permute.xlu0 %1586
        %v1590 = vadd.f32 %v1569, %v1585
        %v1591 = vadd.f32 %v1570, %v1587
        %s1592 = sld [smem:[#allocation3 + $0x5]]
        %v1593 = vstv %s1592
        %v1594 = vmul.f32 %v1593, %v244
        %v1595 = vmul.f32 %v1593, %v245
        %1598 = vrot.lane.b32.xlu0 %v1594, 123
        %v1599 = vpop.permute.xlu0 %1598
        %1600 = vrot.lane.b32.xlu0 %v1595, 123
        %v1601 = vpop.permute.xlu0 %1600
        %v1604 = vadd.f32 %v1590, %v1599
        %v1605 = vadd.f32 %v1591, %v1601
        %s1606 = sld [smem:[#allocation3 + $0xc]]
        %v1607 = vstv %s1606
        %v1608 = vmul.f32 %v1607, %v244
        %v1609 = vmul.f32 %v1607, %v245
        %v1610 = vmul.f32 %v1607, %v246
        %v1614 = vrot.slane %v1608, 1
        %v1615 = vrot.slane %v1609, 1
        %v1616 = vsel %vm261, %v1614, %v1615
        %v1617 = vrot.slane %v1610, 1
        %v1618 = vsel %vm261, %v1615, %v1617
        %1619 = vrot.lane.b32.xlu0 %v1616, 123
        %v1620 = vpop.permute.xlu0 %1619
        %1621 = vrot.lane.b32.xlu0 %v1618, 123
        %v1622 = vpop.permute.xlu0 %1621
        %v1625 = vadd.f32 %v1604, %v1620
        %v1626 = vadd.f32 %v1605, %v1622
        %s1627 = sld [smem:[#allocation3 + $0x13]]
        %v1628 = vstv %s1627
        %v1629 = vmul.f32 %v1628, %v244
        %v1630 = vmul.f32 %v1628, %v245
        %v1631 = vmul.f32 %v1628, %v246
        %v1635 = vrot.slane %v1629, 2
        %v1636 = vrot.slane %v1630, 2
        %v1637 = vsel %vm279, %v1635, %v1636
        %v1638 = vrot.slane %v1631, 2
        %v1639 = vsel %vm279, %v1636, %v1638
        %1640 = vrot.lane.b32.xlu0 %v1637, 123
        %v1641 = vpop.permute.xlu0 %1640
        %1642 = vrot.lane.b32.xlu0 %v1639, 123
        %v1643 = vpop.permute.xlu0 %1642
        %v1646 = vadd.f32 %v1625, %v1641
        %v1647 = vadd.f32 %v1626, %v1643
        %s1648 = sld [smem:[#allocation3 + $0x1a]]
        %v1649 = vstv %s1648
        %v1650 = vmul.f32 %v1649, %v244
        %v1651 = vmul.f32 %v1649, %v245
        %v1652 = vmul.f32 %v1649, %v246
        %v1656 = vrot.slane %v1650, 3
        %v1657 = vrot.slane %v1651, 3
        %v1658 = vsel %vm297, %v1656, %v1657
        %v1659 = vrot.slane %v1652, 3
        %v1660 = vsel %vm297, %v1657, %v1659
        %1661 = vrot.lane.b32.xlu0 %v1658, 123
        %v1662 = vpop.permute.xlu0 %1661
        %1663 = vrot.lane.b32.xlu0 %v1660, 123
        %v1664 = vpop.permute.xlu0 %1663
        %v1667 = vadd.f32 %v1646, %v1662
        %v1668 = vadd.f32 %v1647, %v1664
        %s1669 = sld [smem:[#allocation3 + $0x21]]
        %v1670 = vstv %s1669
        %v1671 = vmul.f32 %v1670, %v244
        %v1672 = vmul.f32 %v1670, %v245
        %v1673 = vmul.f32 %v1670, %v246
        %v1677 = vrot.slane %v1671, 4
        %v1678 = vrot.slane %v1672, 4
        %v1679 = vsel %vm315, %v1677, %v1678
        %v1680 = vrot.slane %v1673, 4
        %v1681 = vsel %vm315, %v1678, %v1680
        %1682 = vrot.lane.b32.xlu0 %v1679, 123
        %v1683 = vpop.permute.xlu0 %1682
        %1684 = vrot.lane.b32.xlu0 %v1681, 123
        %v1685 = vpop.permute.xlu0 %1684
        %v1688 = vadd.f32 %v1667, %v1683
        %v1689 = vadd.f32 %v1668, %v1685
        %s1690 = sld [smem:[#allocation3 + $0x28]]
        %v1691 = vstv %s1690
        %v1692 = vmul.f32 %v1691, %v244
        %v1693 = vmul.f32 %v1691, %v245
        %v1694 = vmul.f32 %v1691, %v246
        %v1698 = vrot.slane %v1692, 5
        %v1699 = vrot.slane %v1693, 5
        %v1700 = vsel %vm333, %v1698, %v1699
        %v1701 = vrot.slane %v1694, 5
        %v1702 = vsel %vm333, %v1699, %v1701
        %1703 = vrot.lane.b32.xlu0 %v1700, 123
        %v1704 = vpop.permute.xlu0 %1703
        %1705 = vrot.lane.b32.xlu0 %v1702, 123
        %v1706 = vpop.permute.xlu0 %1705
        %v1709 = vadd.f32 %v1688, %v1704
        %v1710 = vadd.f32 %v1689, %v1706
        %s1711 = sld [smem:[#allocation3 + $0x2f]]
        %v1712 = vstv %s1711
        %v1713 = vmul.f32 %v1712, %v244
        %v1714 = vmul.f32 %v1712, %v245
        %v1715 = vmul.f32 %v1712, %v246
        %v1719 = vrot.slane %v1713, 6
        %v1720 = vrot.slane %v1714, 6
        %v1721 = vsel %vm351, %v1719, %v1720
        %v1722 = vrot.slane %v1715, 6
        %v1723 = vsel %vm351, %v1720, %v1722
        %1724 = vrot.lane.b32.xlu0 %v1721, 123
        %v1725 = vpop.permute.xlu0 %1724
        %1726 = vrot.lane.b32.xlu0 %v1723, 123
        %v1727 = vpop.permute.xlu0 %1726
        %v1730 = vadd.f32 %v1709, %v1725
        %v1731 = vadd.f32 %v1710, %v1727
        %s1732 = sld [smem:[#allocation3 + $0x36]]
        %v1733 = vstv %s1732
        %v1734 = vmul.f32 %v1733, %v361
        %v1735 = vmul.f32 %v1733, %v362
        %1738 = vrot.lane.b32.xlu0 %v1734, 123
        %v1739 = vpop.permute.xlu0 %1738
        %1740 = vrot.lane.b32.xlu0 %v1735, 123
        %v1741 = vpop.permute.xlu0 %1740
        %v1744 = vadd.f32 %v1730, %v1739
        %v1745 = vadd.f32 %v1731, %v1741
        %s1746 = sld [smem:[#allocation3 + $0x3d]]
        %v1747 = vstv %s1746
        %v1748 = vmul.f32 %v1747, %v361
        %v1749 = vmul.f32 %v1747, %v362
        %v1750 = vmul.f32 %v1747, %v363
        %v1754 = vrot.slane %v1748, 1
        %v1755 = vrot.slane %v1749, 1
        %v1756 = vsel %vm261, %v1754, %v1755
        %v1757 = vrot.slane %v1750, 1
        %v1758 = vsel %vm261, %v1755, %v1757
        %1759 = vrot.lane.b32.xlu0 %v1756, 123
        %v1760 = vpop.permute.xlu0 %1759
        %1761 = vrot.lane.b32.xlu0 %v1758, 123
        %v1762 = vpop.permute.xlu0 %1761
        %v1765 = vadd.f32 %v1744, %v1760
        %v1766 = vadd.f32 %v1745, %v1762
        %s1767 = sld [smem:[#allocation3 + $0x44]]
        %v1768 = vstv %s1767
        %v1769 = vmul.f32 %v1768, %v361
        %v1770 = vmul.f32 %v1768, %v362
        %v1771 = vmul.f32 %v1768, %v363
        %v1775 = vrot.slane %v1769, 2
        %v1776 = vrot.slane %v1770, 2
        %v1777 = vsel %vm279, %v1775, %v1776
        %v1778 = vrot.slane %v1771, 2
        %v1779 = vsel %vm279, %v1776, %v1778
        %1780 = vrot.lane.b32.xlu0 %v1777, 123
        %v1781 = vpop.permute.xlu0 %1780
        %1782 = vrot.lane.b32.xlu0 %v1779, 123
        %v1783 = vpop.permute.xlu0 %1782
        %v1786 = vadd.f32 %v1765, %v1781
        %v1787 = vadd.f32 %v1766, %v1783
        %s1788 = sld [smem:[#allocation3 + $0x4b]]
        %v1789 = vstv %s1788
        %v1790 = vmul.f32 %v1789, %v361
        %v1791 = vmul.f32 %v1789, %v362
        %v1792 = vmul.f32 %v1789, %v363
        %v1796 = vrot.slane %v1790, 3
        %v1797 = vrot.slane %v1791, 3
        %v1798 = vsel %vm297, %v1796, %v1797
        %v1799 = vrot.slane %v1792, 3
        %v1800 = vsel %vm297, %v1797, %v1799
        %1801 = vrot.lane.b32.xlu0 %v1798, 123
        %v1802 = vpop.permute.xlu0 %1801
        %1803 = vrot.lane.b32.xlu0 %v1800, 123
        %v1804 = vpop.permute.xlu0 %1803
        %v1807 = vadd.f32 %v1786, %v1802
        %v1808 = vadd.f32 %v1787, %v1804
        %s1809 = sld [smem:[#allocation3 + $0x52]]
        %v1810 = vstv %s1809
        %v1811 = vmul.f32 %v1810, %v361
        %v1812 = vmul.f32 %v1810, %v362
        %v1813 = vmul.f32 %v1810, %v363
        %v1817 = vrot.slane %v1811, 4
        %v1818 = vrot.slane %v1812, 4
        %v1819 = vsel %vm315, %v1817, %v1818
        %v1820 = vrot.slane %v1813, 4
        %v1821 = vsel %vm315, %v1818, %v1820
        %1822 = vrot.lane.b32.xlu0 %v1819, 123
        %v1823 = vpop.permute.xlu0 %1822
        %1824 = vrot.lane.b32.xlu0 %v1821, 123
        %v1825 = vpop.permute.xlu0 %1824
        %v1828 = vadd.f32 %v1807, %v1823
        %v1829 = vadd.f32 %v1808, %v1825
        %s1830 = sld [smem:[#allocation3 + $0x59]]
        %v1831 = vstv %s1830
        %v1832 = vmul.f32 %v1831, %v361
        %v1833 = vmul.f32 %v1831, %v362
        %v1834 = vmul.f32 %v1831, %v363
        %v1838 = vrot.slane %v1832, 5
        %v1839 = vrot.slane %v1833, 5
        %v1840 = vsel %vm333, %v1838, %v1839
        %v1841 = vrot.slane %v1834, 5
        %v1842 = vsel %vm333, %v1839, %v1841
        %1843 = vrot.lane.b32.xlu0 %v1840, 123
        %v1844 = vpop.permute.xlu0 %1843
        %1845 = vrot.lane.b32.xlu0 %v1842, 123
        %v1846 = vpop.permute.xlu0 %1845
        %v1849 = vadd.f32 %v1828, %v1844
        %v1850 = vadd.f32 %v1829, %v1846
        %s1851 = sld [smem:[#allocation3 + $0x60]]
        %v1852 = vstv %s1851
        %v1853 = vmul.f32 %v1852, %v361
        %v1854 = vmul.f32 %v1852, %v362
        %v1855 = vmul.f32 %v1852, %v363
        %v1859 = vrot.slane %v1853, 6
        %v1860 = vrot.slane %v1854, 6
        %v1861 = vsel %vm351, %v1859, %v1860
        %v1862 = vrot.slane %v1855, 6
        %v1863 = vsel %vm351, %v1860, %v1862
        %1864 = vrot.lane.b32.xlu0 %v1861, 123
        %v1865 = vpop.permute.xlu0 %1864
        %1866 = vrot.lane.b32.xlu0 %v1863, 123
        %v1867 = vpop.permute.xlu0 %1866
        %v1870 = vadd.f32 %v1849, %v1865
        %v1871 = vadd.f32 %v1850, %v1867
        %s1872 = sld [smem:[#allocation3 + $0x6]]
        %v1873 = vstv %s1872
        %v1874 = vmul.f32 %v1873, %v244
        %v1875 = vmul.f32 %v1873, %v245
        %1878 = vrot.lane.b32.xlu0 %v1874, 122
        %v1879 = vpop.permute.xlu0 %1878
        %1880 = vrot.lane.b32.xlu0 %v1875, 122
        %v1881 = vpop.permute.xlu0 %1880
        %v1884 = vadd.f32 %v1870, %v1879
        %v1885 = vadd.f32 %v1871, %v1881
        %s1886 = sld [smem:[#allocation3 + $0xd]]
        %v1887 = vstv %s1886
        %v1888 = vmul.f32 %v1887, %v244
        %v1889 = vmul.f32 %v1887, %v245
        %v1890 = vmul.f32 %v1887, %v246
        %v1894 = vrot.slane %v1888, 1
        %v1895 = vrot.slane %v1889, 1
        %v1896 = vsel %vm261, %v1894, %v1895
        %v1897 = vrot.slane %v1890, 1
        %v1898 = vsel %vm261, %v1895, %v1897
        %1899 = vrot.lane.b32.xlu0 %v1896, 122
        %v1900 = vpop.permute.xlu0 %1899
        %1901 = vrot.lane.b32.xlu0 %v1898, 122
        %v1902 = vpop.permute.xlu0 %1901
        %v1905 = vadd.f32 %v1884, %v1900
        %v1906 = vadd.f32 %v1885, %v1902
        %s1907 = sld [smem:[#allocation3 + $0x14]]
        %v1908 = vstv %s1907
        %v1909 = vmul.f32 %v1908, %v244
        %v1910 = vmul.f32 %v1908, %v245
        %v1911 = vmul.f32 %v1908, %v246
        %v1915 = vrot.slane %v1909, 2
        %v1916 = vrot.slane %v1910, 2
        %v1917 = vsel %vm279, %v1915, %v1916
        %v1918 = vrot.slane %v1911, 2
        %v1919 = vsel %vm279, %v1916, %v1918
        %1920 = vrot.lane.b32.xlu0 %v1917, 122
        %v1921 = vpop.permute.xlu0 %1920
        %1922 = vrot.lane.b32.xlu0 %v1919, 122
        %v1923 = vpop.permute.xlu0 %1922
        %v1926 = vadd.f32 %v1905, %v1921
        %v1927 = vadd.f32 %v1906, %v1923
        %s1928 = sld [smem:[#allocation3 + $0x1b]]
        %v1929 = vstv %s1928
        %v1930 = vmul.f32 %v1929, %v244
        %v1931 = vmul.f32 %v1929, %v245
        %v1932 = vmul.f32 %v1929, %v246
        %v1936 = vrot.slane %v1930, 3
        %v1937 = vrot.slane %v1931, 3
        %v1938 = vsel %vm297, %v1936, %v1937
        %v1939 = vrot.slane %v1932, 3
        %v1940 = vsel %vm297, %v1937, %v1939
        %1941 = vrot.lane.b32.xlu0 %v1938, 122
        %v1942 = vpop.permute.xlu0 %1941
        %1943 = vrot.lane.b32.xlu0 %v1940, 122
        %v1944 = vpop.permute.xlu0 %1943
        %v1947 = vadd.f32 %v1926, %v1942
        %v1948 = vadd.f32 %v1927, %v1944
        %s1949 = sld [smem:[#allocation3 + $0x22]]
        %v1950 = vstv %s1949
        %v1951 = vmul.f32 %v1950, %v244
        %v1952 = vmul.f32 %v1950, %v245
        %v1953 = vmul.f32 %v1950, %v246
        %v1957 = vrot.slane %v1951, 4
        %v1958 = vrot.slane %v1952, 4
        %v1959 = vsel %vm315, %v1957, %v1958
        %v1960 = vrot.slane %v1953, 4
        %v1961 = vsel %vm315, %v1958, %v1960
        %1962 = vrot.lane.b32.xlu0 %v1959, 122
        %v1963 = vpop.permute.xlu0 %1962
        %1964 = vrot.lane.b32.xlu0 %v1961, 122
        %v1965 = vpop.permute.xlu0 %1964
        %v1968 = vadd.f32 %v1947, %v1963
        %v1969 = vadd.f32 %v1948, %v1965
        %s1970 = sld [smem:[#allocation3 + $0x29]]
        %v1971 = vstv %s1970
        %v1972 = vmul.f32 %v1971, %v244
        %v1973 = vmul.f32 %v1971, %v245
        %v1974 = vmul.f32 %v1971, %v246
        %v1978 = vrot.slane %v1972, 5
        %v1979 = vrot.slane %v1973, 5
        %v1980 = vsel %vm333, %v1978, %v1979
        %v1981 = vrot.slane %v1974, 5
        %v1982 = vsel %vm333, %v1979, %v1981
        %1983 = vrot.lane.b32.xlu0 %v1980, 122
        %v1984 = vpop.permute.xlu0 %1983
        %1985 = vrot.lane.b32.xlu0 %v1982, 122
        %v1986 = vpop.permute.xlu0 %1985
        %v1989 = vadd.f32 %v1968, %v1984
        %v1990 = vadd.f32 %v1969, %v1986
        %s1991 = sld [smem:[#allocation3 + $0x30]]
        %v1992 = vstv %s1991
        %v1993 = vmul.f32 %v1992, %v244
        %v1994 = vmul.f32 %v1992, %v245
        %v1995 = vmul.f32 %v1992, %v246
        %v1999 = vrot.slane %v1993, 6
        %v2000 = vrot.slane %v1994, 6
        %v2001 = vsel %vm351, %v1999, %v2000
        %v2002 = vrot.slane %v1995, 6
        %v2003 = vsel %vm351, %v2000, %v2002
        %2004 = vrot.lane.b32.xlu0 %v2001, 122
        %v2005 = vpop.permute.xlu0 %2004
        %2006 = vrot.lane.b32.xlu0 %v2003, 122
        %v2007 = vpop.permute.xlu0 %2006
        %v2010 = vadd.f32 %v1989, %v2005
        %v2011 = vadd.f32 %v1990, %v2007
        %s2012 = sld [smem:[#allocation3 + $0x37]]
        %v2013 = vstv %s2012
        %v2014 = vmul.f32 %v2013, %v361
        %v2015 = vmul.f32 %v2013, %v362
        %2018 = vrot.lane.b32.xlu0 %v2014, 122
        %v2019 = vpop.permute.xlu0 %2018
        %2020 = vrot.lane.b32.xlu0 %v2015, 122
        %v2021 = vpop.permute.xlu0 %2020
        %v2024 = vadd.f32 %v2010, %v2019
        %v2025 = vadd.f32 %v2011, %v2021
        %s2026 = sld [smem:[#allocation3 + $0x3e]]
        %v2027 = vstv %s2026
        %v2028 = vmul.f32 %v2027, %v361
        %v2029 = vmul.f32 %v2027, %v362
        %v2030 = vmul.f32 %v2027, %v363
        %v2034 = vrot.slane %v2028, 1
        %v2035 = vrot.slane %v2029, 1
        %v2036 = vsel %vm261, %v2034, %v2035
        %v2037 = vrot.slane %v2030, 1
        %v2038 = vsel %vm261, %v2035, %v2037
        %2039 = vrot.lane.b32.xlu0 %v2036, 122
        %v2040 = vpop.permute.xlu0 %2039
        %2041 = vrot.lane.b32.xlu0 %v2038, 122
        %v2042 = vpop.permute.xlu0 %2041
        %v2045 = vadd.f32 %v2024, %v2040
        %v2046 = vadd.f32 %v2025, %v2042
        %s2047 = sld [smem:[#allocation3 + $0x45]]
        %v2048 = vstv %s2047
        %v2049 = vmul.f32 %v2048, %v361
        %v2050 = vmul.f32 %v2048, %v362
        %v2051 = vmul.f32 %v2048, %v363
        %v2055 = vrot.slane %v2049, 2
        %v2056 = vrot.slane %v2050, 2
        %v2057 = vsel %vm279, %v2055, %v2056
        %v2058 = vrot.slane %v2051, 2
        %v2059 = vsel %vm279, %v2056, %v2058
        %2060 = vrot.lane.b32.xlu0 %v2057, 122
        %v2061 = vpop.permute.xlu0 %2060
        %2062 = vrot.lane.b32.xlu0 %v2059, 122
        %v2063 = vpop.permute.xlu0 %2062
        %v2066 = vadd.f32 %v2045, %v2061
        %v2067 = vadd.f32 %v2046, %v2063
        %s2068 = sld [smem:[#allocation3 + $0x4c]]
        %v2069 = vstv %s2068
        %v2070 = vmul.f32 %v2069, %v361
        %v2071 = vmul.f32 %v2069, %v362
        %v2072 = vmul.f32 %v2069, %v363
        %v2076 = vrot.slane %v2070, 3
        %v2077 = vrot.slane %v2071, 3
        %v2078 = vsel %vm297, %v2076, %v2077
        %v2079 = vrot.slane %v2072, 3
        %v2080 = vsel %vm297, %v2077, %v2079
        %2081 = vrot.lane.b32.xlu0 %v2078, 122
        %v2082 = vpop.permute.xlu0 %2081
        %2083 = vrot.lane.b32.xlu0 %v2080, 122
        %v2084 = vpop.permute.xlu0 %2083
        %v2087 = vadd.f32 %v2066, %v2082
        %v2088 = vadd.f32 %v2067, %v2084
        %s2089 = sld [smem:[#allocation3 + $0x53]]
        %v2090 = vstv %s2089
        %v2091 = vmul.f32 %v2090, %v361
        %v2092 = vmul.f32 %v2090, %v362
        %v2093 = vmul.f32 %v2090, %v363
        %v2097 = vrot.slane %v2091, 4
        %v2098 = vrot.slane %v2092, 4
        %v2099 = vsel %vm315, %v2097, %v2098
        %v2100 = vrot.slane %v2093, 4
        %v2101 = vsel %vm315, %v2098, %v2100
        %2102 = vrot.lane.b32.xlu0 %v2099, 122
        %v2103 = vpop.permute.xlu0 %2102
        %2104 = vrot.lane.b32.xlu0 %v2101, 122
        %v2105 = vpop.permute.xlu0 %2104
        %v2108 = vadd.f32 %v2087, %v2103
        %v2109 = vadd.f32 %v2088, %v2105
        %s2110 = sld [smem:[#allocation3 + $0x5a]]
        %v2111 = vstv %s2110
        %v2112 = vmul.f32 %v2111, %v361
        %v2113 = vmul.f32 %v2111, %v362
        %v2114 = vmul.f32 %v2111, %v363
        %v2118 = vrot.slane %v2112, 5
        %v2119 = vrot.slane %v2113, 5
        %v2120 = vsel %vm333, %v2118, %v2119
        %v2121 = vrot.slane %v2114, 5
        %v2122 = vsel %vm333, %v2119, %v2121
        %2123 = vrot.lane.b32.xlu0 %v2120, 122
        %v2124 = vpop.permute.xlu0 %2123
        %2125 = vrot.lane.b32.xlu0 %v2122, 122
        %v2126 = vpop.permute.xlu0 %2125
        %v2129 = vadd.f32 %v2108, %v2124
        %v2130 = vadd.f32 %v2109, %v2126
        %s2131 = sld [smem:[#allocation3 + $0x61]]
        %v2132 = vstv %s2131
        %v2133 = vmul.f32 %v2132, %v361
        %v2134 = vmul.f32 %v2132, %v362
        %v2135 = vmul.f32 %v2132, %v363
        %v2139 = vrot.slane %v2133, 6
        %v2140 = vrot.slane %v2134, 6
        %v2141 = vsel %vm351, %v2139, %v2140
        %v2142 = vrot.slane %v2135, 6
        %v2143 = vsel %vm351, %v2140, %v2142
        %2144 = vrot.lane.b32.xlu0 %v2141, 122
        %v2145 = vpop.permute.xlu0 %2144
        %2146 = vrot.lane.b32.xlu0 %v2143, 122
        %v2147 = vpop.permute.xlu0 %2146
        %v2150 = vadd.f32 %v2129, %v2145
        %v2151 = vadd.f32 %v2130, %v2147
        %s2152 = sld [smem:[#allocation3 + $0x62]]
        %v2153 = vstv %s2152
        %v2154 = vadd.f32 %v2150, %v2153
        %v2155 = vadd.f32 %v2151, %v2153
        %v2156 = vsub.f32 0.0, %v2154
        %v2157 = vsub.f32 0.0, %v2155
        %v2158 = vmul.f32 %v2156, 1.442695
        %v2159 = vpow.pop %v2158
        %v2160 = vmul.f32 %v2157, 1.442695
        %v2161 = vpow.pop %v2160
        %v2162 = vadd.f32 %v2159, 1.0
        %v2163 = vadd.f32 %v2161, 1.0
        %v2164 = vrcp.pop %v2162
        %v2165 = vmul.f32 1.0, %v2164
        %v2166 = vrcp.pop %v2163
        %v2167 = vmul.f32 1.0, %v2166
        %v2168 = vmul.f32 %v174, %v2165
        %v2169 = vmul.f32 %v175, %v2167
        %v2170 = vmul.f32 %v176, %v2165
        %v2171 = vmul.f32 %v177, %v2167
        %v2172 = vmul.f32 %v178, %v2165
        %v2173 = vmul.f32 %v179, %v2167
        %v2174 = vmul.f32 %v180, %v2165
        %v2175 = vmul.f32 %v181, %v2167
        %2176 = vst.msk [vmem:[%s173] sm:$0xff] %vm182, %v2168
        %2177 = vst.msk [vmem:[%s173 + $0x8] sm:$0xff] %vm182, %v2169
        %2178 = vst.msk [vmem:[%s173 + $0x10] sm:$0xff] %vm182, %v2170
        %2179 = vst.msk [vmem:[%s173 + $0x18] sm:$0xff] %vm182, %v2171
        %2180 = vst.msk [vmem:[%s173 + $0x20] sm:$0xff] %vm182, %v2172
        %2181 = vst.msk [vmem:[%s173 + $0x28] sm:$0xff] %vm182, %v2173
        %2182 = vst.msk [vmem:[%s173 + $0x30] sm:$0xff] %vm182, %v2174
        %2183 = vst.msk [vmem:[%s173 + $0x38] sm:$0xff] %vm182, %v2175
        %s2184 = sand.u32 %s75, 1
        %s2185 = scalar_lea.sflag [#allocation5], %s2184
        %s2186 = sand.u32 %s75, 1
        %s2187 = smul.addr %s2186, 64
        %s2188 = scalar_lea.vmem [#allocation8], %s2187
        // Predicated region
        $region37: #{tpu_custom_call.1} parent=27 // pred_check
          %p2189 = pneg %p85
        $region38: #{tpu_custom_call.1} parent=27 // pred_check_branch
          %2191 = sbr.rel (%p2189) target = $region40
        $region39: #{tpu_custom_call.1} parent=27 // pred_region
          %s2193 = ssub.s32 1024, 1024
          %2194 = vsyncadd %s2185, %s2193
          %s2195 = smul.addr %s20, 8
          %s2196 = smul.addr %s2195, 128
          %s2197 = scalar_lea.hbm %s2, %s2196
          %s2198 = sshll.u32 %s2188, 4
          %s2199 = int_to_ptr.vmem [resolvable:$true] %s2198
          %2204 = dma.vmem_to_hbm [thread:$0]  %s2199, 1024, %s2197, %s2185, 128, 128, 8
        $region40: #{tpu_custom_call.1} parent=27 // pred_fallthru
          _
      $region28: #{tpu_custom_call.1} parent=5 // pred_fallthru
        _
      %p2205 = scmp.le.s32.totalorder 2, %s15
      // Predicated region
      $region41: #{tpu_custom_call.1} parent=5 // pred_check
        %p2206 = pneg %p2205
      $region42: #{tpu_custom_call.1} parent=5 // pred_check_branch
        %2208 = sbr.rel (%p2206) target = $region44
      $region43: #{tpu_custom_call.1} parent=5 // pred_region
        %s2209 = ssub.s32 %s15, 2
        // Predicated region
        $region45: #{tpu_custom_call.1} parent=43 // pred_check
          %p2210 = pneg %p91
        $region46: #{tpu_custom_call.1} parent=43 // pred_check_branch
          %2212 = sbr.rel (%p2210) target = $region48
        $region47: #{tpu_custom_call.1} parent=43 // pred_region
          %s2213 = sand.u32 %s76, 1
          %s2214 = scalar_lea.sflag [#allocation5], %s2213
          %s2215 = sand.u32 %s76, 1
          %s2216 = smul.addr %s2215, 64
          %s2217 = scalar_lea.vmem [#allocation8], %s2216
          %2218 = dma.done %s2214, 1024
        $region48: #{tpu_custom_call.1} parent=43 // pred_fallthru
          _
      $region44: #{tpu_custom_call.1} parent=5 // pred_fallthru
        _
    $region6: #{tpu_custom_call.1} parent=1 // loop_footer
      %s19 = sadd.s32 1, %s15
    $region7: #{tpu_custom_call.1} parent=1 // loop_footer_branch
      %14 = sbr.rel target = $region3
    $region8: #{tpu_custom_call.1} parent=1 // loop_exit
      _
    %2219 = vsyncpa [#allocation4], 1
    %s2220 = scalar_lea.sflag [#allocation4], 1
    %2221 = vsyncpa %s2220, 1
    %2222 = vsyncpa [#allocation5], 1
    %s2223 = scalar_lea.sflag [#allocation5], 1
    %2224 = vsyncpa %s2223, 1
    %2225 = vsyncpa [#allocation6], 1
    %s2226 = scalar_lea.sflag [#allocation6], 1
    %2227 = vsyncpa %s2226, 1

</llo_original>
